<compile_context>
chip_gen: v7x
topology: tpu7x:2x2x1
jax: 0.10.0
libtpu: 0.0.40
codegen_flags: <defaults>
</compile_context>

<pallas_src>
import functools
import math

import jax
import jax.numpy as jnp
from jax.experimental import pallas as pl
from jax.experimental.pallas import tpu as pltpu


def _transformer_block_kernel(
    # activations / mask bias
    q_ref, k_ref, v_ref, bias_ref,
    # attention weights (2-D, bf16; WQ/bQ pre-scaled by 1/sqrt(d_k))
    wq_ref, bq_ref, wk_ref, bk_ref, wv_ref, bv_ref, wo_ref, bo_ref,
    # LayerNorm 1
    g1_ref, be1_ref,
    # FFN
    w1_ref, b1_ref, w2_ref, b2_ref,
    # LayerNorm 2
    g2_ref, be2_ref,
    # output
    out_ref,
    # scratch
    kh_ref, vh_ref, qh_ref, merge_ref,
    *, n_head: int, d_k: int, eps: float,
):
    qi = pl.program_id(1)
    cdt = jnp.bfloat16          # MXU operand dtype
    f32 = jnp.float32

    # ---- K / V projections: full-width (L, D) x (D, D) matmuls, computed once per
    # batch element (first query tile) and stashed head-major in persistent VMEM. ----
    @pl.when(qi == 0)
    def _():
        k_all = jnp.dot(k_ref[...].astype(cdt), wk_ref[...],
                        preferred_element_type=f32) + bk_ref[...]
        v_all = jnp.dot(v_ref[...].astype(cdt), wv_ref[...],
                        preferred_element_type=f32) + bv_ref[...]
        for h in range(n_head):                       # layout-only head split
            sl = slice(h * d_k, (h + 1) * d_k)
            kh_ref[h] = k_all[:, sl].astype(cdt)
            vh_ref[h] = v_all[:, sl].astype(cdt)

    # ---- Q projection for this query tile (1/sqrt(d_k) already folded into WQ/bQ). ----
    x_q = q_ref[...].astype(f32)                      # residual / LN path stays fp32
    q_all = jnp.dot(q_ref[...].astype(cdt), wq_ref[...],
                    preferred_element_type=f32) + bq_ref[...]
    for h in range(n_head):                           # layout-only head split
        qh_ref[h] = q_all[:, h * d_k:(h + 1) * d_k].astype(cdt)

    # ---- attention: head-batched matmuls, fp32 accumulation ----
    scores = jnp.einsum('hqd,hkd->hqk', qh_ref[...], kh_ref[...],
                        preferred_element_type=f32)   # (h, TQ, L_k)
    scores = scores + bias_ref[...][None]             # additive -1e10 mask bias

    m = jnp.max(scores, axis=-1, keepdims=True)
    p = jnp.exp(scores - m)
    denom = jnp.sum(p, axis=-1, keepdims=True)
    # deferred normalization: PV matmul on unnormalized p, rescale the small context
    ctx = jnp.einsum('hqk,hkd->hqd', p.astype(cdt), vh_ref[...],
                     preferred_element_type=f32)      # (h, TQ, d_k)
    ctx = ctx * pl.reciprocal(denom, approx=True)

    # ---- merge heads (layout only) and fc_out as a single full-K matmul ----
    for h in range(n_head):
        merge_ref[:, h * d_k:(h + 1) * d_k] = ctx[h]
    attention = jnp.dot(merge_ref[...].astype(cdt), wo_ref[...],
                        preferred_element_type=f32) + bo_ref[...]   # (TQ, D)

    # ---- residual + LayerNorm 1 (fp32) ----
    r1 = attention + x_q
    mu1 = jnp.mean(r1, axis=-1, keepdims=True)
    var1 = jnp.mean(jnp.square(r1 - mu1), axis=-1, keepdims=True)
    X = (r1 - mu1) * jax.lax.rsqrt(var1 + eps) * g1_ref[...] + be1_ref[...]

    # ---- FFN: Linear -> LeakyReLU(0.01) -> Linear (bf16 MXU, fp32 accumulate) ----
    hdn = jnp.dot(X.astype(cdt), w1_ref[...], preferred_element_type=f32) + b1_ref[...]
    hdn = jnp.where(hdn > 0, hdn, f32(0.01) * hdn)
    ffn = jnp.dot(hdn.astype(cdt), w2_ref[...], preferred_element_type=f32) + b2_ref[...]

    # ---- residual + LayerNorm 2 (fp32) ----
    r2 = ffn + X
    mu2 = jnp.mean(r2, axis=-1, keepdims=True)
    var2 = jnp.mean(jnp.square(r2 - mu2), axis=-1, keepdims=True)
    out = (r2 - mu2) * jax.lax.rsqrt(var2 + eps) * g2_ref[...] + be2_ref[...]

    out_ref[...] = out.astype(out_ref.dtype)


def prepare_params(params, n_head):
    """One-time host-side weight prep (call once, reuse across forward calls):
    bf16 matmul weights, fp32 biases/LN params, 1/sqrt(d_k) folded into WQ/bQ."""
    D = params["wq"].shape[0]
    d_k = D // n_head
    cdt = jnp.bfloat16
    scale = jnp.float32(1.0 / math.sqrt(d_k))
    f32 = jnp.float32
    return {
        "wq": (params["wq"] * scale).astype(cdt), "bq": (params["bq"] * scale).astype(f32),
        "wk": params["wk"].astype(cdt),           "bk": params["bk"].astype(f32),
        "wv": params["wv"].astype(cdt),           "bv": params["bv"].astype(f32),
        "wo": params["wo"].astype(cdt),           "bo": params["bo"].astype(f32),
        "g1": params["g1"].astype(f32),           "be1": params["be1"].astype(f32),
        "w1": params["w1"].astype(cdt),           "b1": params["b1"].astype(f32),
        "w2": params["w2"].astype(cdt),           "b2": params["b2"].astype(f32),
        "g2": params["g2"].astype(f32),           "be2": params["be2"].astype(f32),
    }


def _pick_block_q(L):
    for cand in (256, 128, 64, 32, 16, 8):
        if cand <= L and L % cand == 0:
            return cand
    return L


def _vmem_limit_bytes():
    # ~0.75 of physical per-core VMEM: ~96 MiB on v5e/v6e (128 MiB), ~48 MiB on v7x (64 MiB).
    try:
        cap = int(getattr(pltpu.get_tpu_info(), "vmem_capacity_bytes", 128 * 1024 * 1024))
    except Exception:
        cap = 64 * 1024 * 1024
    return max(32 * 1024 * 1024, min((cap * 3) // 4, 112 * 1024 * 1024))


@functools.partial(jax.jit, static_argnames=("n_head",))
def transformer_block(Q, K, V, Mask, prepped, *, n_head):
    B, LQ, D = Q.shape
    LK = K.shape[1]
    assert D % n_head == 0, "d_model must be divisible by n_head"
    d_k = D // n_head
    H = prepped["w1"].shape[1]                 # forward_expansion * d_model
    TQ = _pick_block_q(LQ)
    n_q_tiles = LQ // TQ

    # Additive mask bias: 0 = keep, -1e10 = masked (matches masked_fill(Mask == 0, -1e10)).
    bias = jnp.where(Mask == 0, jnp.float32(-1e10), jnp.float32(0.0))

    # Weights/biases/LN params: constant index_map across the grid, single-buffered.
    def wspec(shape):
        return pl.BlockSpec(shape, lambda b, qi: (0,) * len(shape),
                            pipeline_mode=pl.Buffered(1))

    q_spec = pl.BlockSpec((None, TQ, D), lambda b, qi: (b, qi, 0))
    kv_spec = pl.BlockSpec((None, LK, D), lambda b, qi: (b, 0, 0))
    bias_spec = pl.BlockSpec((None, TQ, LK), lambda b, qi: (b, qi, 0))
    out_spec = pl.BlockSpec((None, TQ, D), lambda b, qi: (b, qi, 0))

    in_specs = [
        q_spec, kv_spec, kv_spec, bias_spec,
        wspec((D, D)), wspec((1, D)),        # WQ (scaled), bQ (scaled)
        wspec((D, D)), wspec((1, D)),        # WK, bK
        wspec((D, D)), wspec((1, D)),        # WV, bV
        wspec((D, D)), wspec((1, D)),        # fc_out W, b
        wspec((1, D)), wspec((1, D)),        # LN1 gamma, beta
        wspec((D, H)), wspec((1, H)),        # FFN W1, b1
        wspec((H, D)), wspec((1, D)),        # FFN W2, b2
        wspec((1, D)), wspec((1, D)),        # LN2 gamma, beta
    ]

    scratch_shapes = [
        pltpu.VMEM((n_head, LK, d_k), jnp.bfloat16),   # K heads (persist across q tiles)
        pltpu.VMEM((n_head, LK, d_k), jnp.bfloat16),   # V heads (persist across q tiles)
        pltpu.VMEM((n_head, TQ, d_k), jnp.bfloat16),   # Q heads (current tile)
        pltpu.VMEM((TQ, D), jnp.float32),              # merged heads -> fc_out input
    ]

    kernel = functools.partial(_transformer_block_kernel,
                               n_head=n_head, d_k=d_k, eps=1e-5)

    flops = B * (8 * LQ * D * D + 4 * LQ * LK * D + 4 * LQ * D * H)
    transcend = B * n_head * LQ * LK
    bytes_acc = int(
        (2 * B * LQ * D + 2 * B * LK * D) * Q.dtype.itemsize   # Q, K, V in + out
        + 4 * B * LQ * LK                                      # fp32 additive mask bias
        + (4 * D * D + 2 * D * H) * 2                          # bf16 matmul weights
        + (8 * D + H) * 4)                                     # fp32 biases / LN params

    return pl.pallas_call(
        kernel,
        out_shape=jax.ShapeDtypeStruct((B, LQ, D), Q.dtype),
        grid_spec=pltpu.PrefetchScalarGridSpec(
            num_scalar_prefetch=0,
            grid=(B, n_q_tiles),
            in_specs=in_specs,
            out_specs=out_spec,
            scratch_shapes=scratch_shapes,
        ),
        compiler_params=pltpu.CompilerParams(
            # batch is fully independent; query-tile axis is sequential (K/V scratch reuse)
            dimension_semantics=("parallel", "arbitrary"),
            vmem_limit_bytes=_vmem_limit_bytes(),
        ),
        cost_estimate=pl.CostEstimate(
            flops=flops, transcendentals=transcend, bytes_accessed=bytes_acc),
    )(
        Q, K, V, bias,
        prepped["wq"], prepped["bq"], prepped["wk"], prepped["bk"],
        prepped["wv"], prepped["bv"], prepped["wo"], prepped["bo"],
        prepped["g1"], prepped["be1"],
        prepped["w1"], prepped["b1"], prepped["w2"], prepped["b2"],
        prepped["g2"], prepped["be2"],
    )


def make_params(key, d_model, n_head, forward_expansion=2):
    H = forward_expansion * d_model
    ks = jax.random.split(key, 12)
    s = 0.05
    # Linear weights stored as (in, out) — i.e. already W.T relative to nn.Linear.
    return {
        "wq": jax.random.normal(ks[0], (d_model, d_model), jnp.float32) * s,
        "bq": jax.random.normal(ks[1], (1, d_model), jnp.float32) * s,
        "wk": jax.random.normal(ks[2], (d_model, d_model), jnp.float32) * s,
        "bk": jax.random.normal(ks[3], (1, d_model), jnp.float32) * s,
        "wv": jax.random.normal(ks[4], (d_model, d_model), jnp.float32) * s,
        "bv": jax.random.normal(ks[5], (1, d_model), jnp.float32) * s,
        "wo": jax.random.normal(ks[6], (d_model, d_model), jnp.float32) * s,
        "bo": jax.random.normal(ks[7], (1, d_model), jnp.float32) * s,
        "g1": jnp.ones((1, d_model), jnp.float32),
        "be1": jnp.zeros((1, d_model), jnp.float32),
        "w1": jax.random.normal(ks[8], (d_model, H), jnp.float32) * s,
        "b1": jax.random.normal(ks[9], (1, H), jnp.float32) * s,
        "w2": jax.random.normal(ks[10], (H, d_model), jnp.float32) * s,
        "b2": jax.random.normal(ks[11], (1, d_model), jnp.float32) * s,
        "g2": jnp.ones((1, d_model), jnp.float32),
        "be2": jnp.zeros((1, d_model), jnp.float32),
    }


if __name__ == "__main__":
    B, L, d_model, n_head = 2, 8, 32, 4

    key = jax.random.PRNGKey(0)
    kq, kk, kv, kp = jax.random.split(key, 4)
    Q = jax.random.normal(kq, (B, L, d_model), jnp.float32)
    K = jax.random.normal(kk, (B, L, d_model), jnp.float32)
    V = jax.random.normal(kv, (B, L, d_model), jnp.float32)

    # causal mask: 1 = keep, 0 = masked (matches masked_fill(Mask == 0, -1e10))
    Mask = jnp.tril(jnp.ones((L, L), jnp.float32))[None].repeat(B, axis=0)

    params = make_params(kp, d_model, n_head, forward_expansion=2)
    prepped = prepare_params(params, n_head)   # one-time weight prep, reused across calls

    # TODO(synk): dropout layers are identity (eval-mode); training-mode dropout not implemented.
    out = transformer_block(Q, K, V, Mask, prepped, n_head=n_head)
    jax.block_until_ready(out)
    assert out.shape == (B, L, d_model)
    print("KERNEL_OK")
</pallas_src>

<mosaic_0001>
module attributes {stable_mosaic.version = 11 : i64} {
  func.func @_transformer_block_kernel(%arg0: i32, %arg1: i32, %arg2: memref<1x8x32xf32, #tpu.memory_space<vmem>>, %arg3: memref<1x8x32xf32, #tpu.memory_space<vmem>>, %arg4: memref<1x8x32xf32, #tpu.memory_space<vmem>>, %arg5: memref<1x8x8xf32, #tpu.memory_space<vmem>>, %arg6: memref<32x32xbf16, #tpu.memory_space<vmem>>, %arg7: memref<1x32xf32, #tpu.memory_space<vmem>>, %arg8: memref<32x32xbf16, #tpu.memory_space<vmem>>, %arg9: memref<1x32xf32, #tpu.memory_space<vmem>>, %arg10: memref<32x32xbf16, #tpu.memory_space<vmem>>, %arg11: memref<1x32xf32, #tpu.memory_space<vmem>>, %arg12: memref<32x32xbf16, #tpu.memory_space<vmem>>, %arg13: memref<1x32xf32, #tpu.memory_space<vmem>>, %arg14: memref<1x32xf32, #tpu.memory_space<vmem>>, %arg15: memref<1x32xf32, #tpu.memory_space<vmem>>, %arg16: memref<32x64xbf16, #tpu.memory_space<vmem>>, %arg17: memref<1x64xf32, #tpu.memory_space<vmem>>, %arg18: memref<64x32xbf16, #tpu.memory_space<vmem>>, %arg19: memref<1x32xf32, #tpu.memory_space<vmem>>, %arg20: memref<1x32xf32, #tpu.memory_space<vmem>>, %arg21: memref<1x32xf32, #tpu.memory_space<vmem>>, %arg22: memref<1x8x32xf32, #tpu.memory_space<vmem>>, %arg23: memref<4x8x8xbf16, #tpu.memory_space<vmem>>, %arg24: memref<4x8x8xbf16, #tpu.memory_space<vmem>>, %arg25: memref<4x8x8xbf16, #tpu.memory_space<vmem>>, %arg26: memref<8x32xf32, #tpu.memory_space<vmem>>) attributes {dimension_semantics = [#tpu.dimension_semantics<parallel>, #tpu.dimension_semantics<arbitrary>], iteration_bounds = array<i64: 2, 1>, scalar_prefetch = 0 : i64, scratch_operands = 4 : i64, tpu.core_type = #tpu.core_type<tc>, window_params = [{transform_indices = @transform_0, window_bounds = array<i64: 1, 8, 32>}, {transform_indices = @transform_1, window_bounds = array<i64: 1, 8, 32>}, {transform_indices = @transform_2, window_bounds = array<i64: 1, 8, 32>}, {transform_indices = @transform_3, window_bounds = array<i64: 1, 8, 8>}, {pipeline_mode = #tpu.pipeline_mode<synchronous>, transform_indices = @transform_4, window_bounds = array<i64: 32, 32>}, {pipeline_mode = #tpu.pipeline_mode<synchronous>, transform_indices = @transform_5, window_bounds = array<i64: 1, 32>}, {pipeline_mode = #tpu.pipeline_mode<synchronous>, transform_indices = @transform_6, window_bounds = array<i64: 32, 32>}, {pipeline_mode = #tpu.pipeline_mode<synchronous>, transform_indices = @transform_7, window_bounds = array<i64: 1, 32>}, {pipeline_mode = #tpu.pipeline_mode<synchronous>, transform_indices = @transform_8, window_bounds = array<i64: 32, 32>}, {pipeline_mode = #tpu.pipeline_mode<synchronous>, transform_indices = @transform_9, window_bounds = array<i64: 1, 32>}, {pipeline_mode = #tpu.pipeline_mode<synchronous>, transform_indices = @transform_10, window_bounds = array<i64: 32, 32>}, {pipeline_mode = #tpu.pipeline_mode<synchronous>, transform_indices = @transform_11, window_bounds = array<i64: 1, 32>}, {pipeline_mode = #tpu.pipeline_mode<synchronous>, transform_indices = @transform_12, window_bounds = array<i64: 1, 32>}, {pipeline_mode = #tpu.pipeline_mode<synchronous>, transform_indices = @transform_13, window_bounds = array<i64: 1, 32>}, {pipeline_mode = #tpu.pipeline_mode<synchronous>, transform_indices = @transform_14, window_bounds = array<i64: 32, 64>}, {pipeline_mode = #tpu.pipeline_mode<synchronous>, transform_indices = @transform_15, window_bounds = array<i64: 1, 64>}, {pipeline_mode = #tpu.pipeline_mode<synchronous>, transform_indices = @transform_16, window_bounds = array<i64: 64, 32>}, {pipeline_mode = #tpu.pipeline_mode<synchronous>, transform_indices = @transform_17, window_bounds = array<i64: 1, 32>}, {pipeline_mode = #tpu.pipeline_mode<synchronous>, transform_indices = @transform_18, window_bounds = array<i64: 1, 32>}, {pipeline_mode = #tpu.pipeline_mode<synchronous>, transform_indices = @transform_19, window_bounds = array<i64: 1, 32>}, {transform_indices = @transform_20, window_bounds = array<i64: 1, 8, 32>}]} {
    %c0_i32 = arith.constant 0 : i32
    %0 = arith.cmpi eq, %arg1, %c0_i32 : i32
    %1 = arith.extui %0 : i1 to i32
    %c0_i32_0 = arith.constant 0 : i32
    %2 = arith.cmpi ne, %1, %c0_i32_0 : i32
    scf.if %2 {
      %c0_80 = arith.constant 0 : index
      %c0_81 = arith.constant 0 : index
      %c0_82 = arith.constant 0 : index
      %143 = vector.load %arg3[%c0_80, %c0_81, %c0_82] : memref<1x8x32xf32, #tpu.memory_space<vmem>>, vector<1x8x32xf32>
      %144 = vector.shape_cast %143 : vector<1x8x32xf32> to vector<8x32xf32>
      %145 = arith.truncf %144 : vector<8x32xf32> to vector<8x32xbf16>
      %c0_83 = arith.constant 0 : index
      %c0_84 = arith.constant 0 : index
      %146 = vector.load %arg8[%c0_83, %c0_84] : memref<32x32xbf16, #tpu.memory_space<vmem>>, vector<32x32xbf16>
      %cst_85 = arith.constant dense<0.000000e+00> : vector<8x32xf32>
      %147 = tpu.matmul %145, %146, %cst_85 {dimension_numbers = #tpu.dot_dimension_numbers<[1], [0], [0], [1], [0, 0, 1, 1], [], []>} : vector<8x32xbf16>, vector<32x32xbf16>, vector<8x32xf32> -> vector<8x32xf32>
      %c0_86 = arith.constant 0 : index
      %c0_87 = arith.constant 0 : index
      %148 = vector.load %arg9[%c0_86, %c0_87] : memref<1x32xf32, #tpu.memory_space<vmem>>, vector<1x32xf32>
      %149 = vector.broadcast %148 : vector<1x32xf32> to vector<8x32xf32>
      %150 = arith.addf %147, %149 : vector<8x32xf32>
      %c0_88 = arith.constant 0 : index
      %c0_89 = arith.constant 0 : index
      %c0_90 = arith.constant 0 : index
      %151 = vector.load %arg4[%c0_88, %c0_89, %c0_90] : memref<1x8x32xf32, #tpu.memory_space<vmem>>, vector<1x8x32xf32>
      %152 = vector.shape_cast %151 : vector<1x8x32xf32> to vector<8x32xf32>
      %153 = arith.truncf %152 : vector<8x32xf32> to vector<8x32xbf16>
      %c0_91 = arith.constant 0 : index
      %c0_92 = arith.constant 0 : index
      %154 = vector.load %arg10[%c0_91, %c0_92] : memref<32x32xbf16, #tpu.memory_space<vmem>>, vector<32x32xbf16>
      %cst_93 = arith.constant dense<0.000000e+00> : vector<8x32xf32>
      %155 = tpu.matmul %153, %154, %cst_93 {dimension_numbers = #tpu.dot_dimension_numbers<[1], [0], [0], [1], [0, 0, 1, 1], [], []>} : vector<8x32xbf16>, vector<32x32xbf16>, vector<8x32xf32> -> vector<8x32xf32>
      %c0_94 = arith.constant 0 : index
      %c0_95 = arith.constant 0 : index
      %156 = vector.load %arg11[%c0_94, %c0_95] : memref<1x32xf32, #tpu.memory_space<vmem>>, vector<1x32xf32>
      %157 = vector.broadcast %156 : vector<1x32xf32> to vector<8x32xf32>
      %158 = arith.addf %155, %157 : vector<8x32xf32>
      %159 = vector.extract_strided_slice %150 {offsets = [0, 0], sizes = [8, 8], strides = [1, 1]} : vector<8x32xf32> to vector<8x8xf32>
      %160 = arith.truncf %159 : vector<8x8xf32> to vector<8x8xbf16>
      %c0_96 = arith.constant 0 : index
      %c0_97 = arith.constant 0 : index
      %c0_98 = arith.constant 0 : index
      %161 = vector.load %arg23[%c0_96, %c0_97, %c0_98] : memref<4x8x8xbf16, #tpu.memory_space<vmem>>, vector<1x8x8xbf16>
      %162 = vector.shape_cast %161 : vector<1x8x8xbf16> to vector<8x8xbf16>
      %163 = vector.shape_cast %160 : vector<8x8xbf16> to vector<1x8x8xbf16>
      tpu.vector_store %arg23[%c0_96, %c0_97, %c0_98], %163 {strides = array<i32>} : memref<4x8x8xbf16, #tpu.memory_space<vmem>>, vector<1x8x8xbf16>,
      %164 = vector.extract_strided_slice %158 {offsets = [0, 0], sizes = [8, 8], strides = [1, 1]} : vector<8x32xf32> to vector<8x8xf32>
      %165 = arith.truncf %164 : vector<8x8xf32> to vector<8x8xbf16>
      %c0_99 = arith.constant 0 : index
      %c0_100 = arith.constant 0 : index
      %c0_101 = arith.constant 0 : index
      %166 = vector.load %arg24[%c0_99, %c0_100, %c0_101] : memref<4x8x8xbf16, #tpu.memory_space<vmem>>, vector<1x8x8xbf16>
      %167 = vector.shape_cast %166 : vector<1x8x8xbf16> to vector<8x8xbf16>
      %168 = vector.shape_cast %165 : vector<8x8xbf16> to vector<1x8x8xbf16>
      tpu.vector_store %arg24[%c0_99, %c0_100, %c0_101], %168 {strides = array<i32>} : memref<4x8x8xbf16, #tpu.memory_space<vmem>>, vector<1x8x8xbf16>,
      %169 = vector.extract_strided_slice %150 {offsets = [0, 8], sizes = [8, 8], strides = [1, 1]} : vector<8x32xf32> to vector<8x8xf32>
      %170 = arith.truncf %169 : vector<8x8xf32> to vector<8x8xbf16>
      %c1_102 = arith.constant 1 : index
      %c0_103 = arith.constant 0 : index
      %c0_104 = arith.constant 0 : index
      %171 = vector.load %arg23[%c1_102, %c0_103, %c0_104] : memref<4x8x8xbf16, #tpu.memory_space<vmem>>, vector<1x8x8xbf16>
      %172 = vector.shape_cast %171 : vector<1x8x8xbf16> to vector<8x8xbf16>
      %173 = vector.shape_cast %170 : vector<8x8xbf16> to vector<1x8x8xbf16>
      tpu.vector_store %arg23[%c1_102, %c0_103, %c0_104], %173 {strides = array<i32>} : memref<4x8x8xbf16, #tpu.memory_space<vmem>>, vector<1x8x8xbf16>,
      %174 = vector.extract_strided_slice %158 {offsets = [0, 8], sizes = [8, 8], strides = [1, 1]} : vector<8x32xf32> to vector<8x8xf32>
      %175 = arith.truncf %174 : vector<8x8xf32> to vector<8x8xbf16>
      %c1_105 = arith.constant 1 : index
      %c0_106 = arith.constant 0 : index
      %c0_107 = arith.constant 0 : index
      %176 = vector.load %arg24[%c1_105, %c0_106, %c0_107] : memref<4x8x8xbf16, #tpu.memory_space<vmem>>, vector<1x8x8xbf16>
      %177 = vector.shape_cast %176 : vector<1x8x8xbf16> to vector<8x8xbf16>
      %178 = vector.shape_cast %175 : vector<8x8xbf16> to vector<1x8x8xbf16>
      tpu.vector_store %arg24[%c1_105, %c0_106, %c0_107], %178 {strides = array<i32>} : memref<4x8x8xbf16, #tpu.memory_space<vmem>>, vector<1x8x8xbf16>,
      %179 = vector.extract_strided_slice %150 {offsets = [0, 16], sizes = [8, 8], strides = [1, 1]} : vector<8x32xf32> to vector<8x8xf32>
      %180 = arith.truncf %179 : vector<8x8xf32> to vector<8x8xbf16>
      %c2_108 = arith.constant 2 : index
      %c0_109 = arith.constant 0 : index
      %c0_110 = arith.constant 0 : index
      %181 = vector.load %arg23[%c2_108, %c0_109, %c0_110] : memref<4x8x8xbf16, #tpu.memory_space<vmem>>, vector<1x8x8xbf16>
      %182 = vector.shape_cast %181 : vector<1x8x8xbf16> to vector<8x8xbf16>
      %183 = vector.shape_cast %180 : vector<8x8xbf16> to vector<1x8x8xbf16>
      tpu.vector_store %arg23[%c2_108, %c0_109, %c0_110], %183 {strides = array<i32>} : memref<4x8x8xbf16, #tpu.memory_space<vmem>>, vector<1x8x8xbf16>,
      %184 = vector.extract_strided_slice %158 {offsets = [0, 16], sizes = [8, 8], strides = [1, 1]} : vector<8x32xf32> to vector<8x8xf32>
      %185 = arith.truncf %184 : vector<8x8xf32> to vector<8x8xbf16>
      %c2_111 = arith.constant 2 : index
      %c0_112 = arith.constant 0 : index
      %c0_113 = arith.constant 0 : index
      %186 = vector.load %arg24[%c2_111, %c0_112, %c0_113] : memref<4x8x8xbf16, #tpu.memory_space<vmem>>, vector<1x8x8xbf16>
      %187 = vector.shape_cast %186 : vector<1x8x8xbf16> to vector<8x8xbf16>
      %188 = vector.shape_cast %185 : vector<8x8xbf16> to vector<1x8x8xbf16>
      tpu.vector_store %arg24[%c2_111, %c0_112, %c0_113], %188 {strides = array<i32>} : memref<4x8x8xbf16, #tpu.memory_space<vmem>>, vector<1x8x8xbf16>,
      %189 = vector.extract_strided_slice %150 {offsets = [0, 24], sizes = [8, 8], strides = [1, 1]} : vector<8x32xf32> to vector<8x8xf32>
      %190 = arith.truncf %189 : vector<8x8xf32> to vector<8x8xbf16>
      %c3_114 = arith.constant 3 : index
      %c0_115 = arith.constant 0 : index
      %c0_116 = arith.constant 0 : index
      %191 = vector.load %arg23[%c3_114, %c0_115, %c0_116] : memref<4x8x8xbf16, #tpu.memory_space<vmem>>, vector<1x8x8xbf16>
      %192 = vector.shape_cast %191 : vector<1x8x8xbf16> to vector<8x8xbf16>
      %193 = vector.shape_cast %190 : vector<8x8xbf16> to vector<1x8x8xbf16>
      tpu.vector_store %arg23[%c3_114, %c0_115, %c0_116], %193 {strides = array<i32>} : memref<4x8x8xbf16, #tpu.memory_space<vmem>>, vector<1x8x8xbf16>,
      %194 = vector.extract_strided_slice %158 {offsets = [0, 24], sizes = [8, 8], strides = [1, 1]} : vector<8x32xf32> to vector<8x8xf32>
      %195 = arith.truncf %194 : vector<8x8xf32> to vector<8x8xbf16>
      %c3_117 = arith.constant 3 : index
      %c0_118 = arith.constant 0 : index
      %c0_119 = arith.constant 0 : index
      %196 = vector.load %arg24[%c3_117, %c0_118, %c0_119] : memref<4x8x8xbf16, #tpu.memory_space<vmem>>, vector<1x8x8xbf16>
      %197 = vector.shape_cast %196 : vector<1x8x8xbf16> to vector<8x8xbf16>
      %198 = vector.shape_cast %195 : vector<8x8xbf16> to vector<1x8x8xbf16>
      tpu.vector_store %arg24[%c3_117, %c0_118, %c0_119], %198 {strides = array<i32>} : memref<4x8x8xbf16, #tpu.memory_space<vmem>>, vector<1x8x8xbf16>,
    } else {
    }
    %c0 = arith.constant 0 : index
    %c0_1 = arith.constant 0 : index
    %c0_2 = arith.constant 0 : index
    %3 = vector.load %arg2[%c0, %c0_1, %c0_2] : memref<1x8x32xf32, #tpu.memory_space<vmem>>, vector<1x8x32xf32>
    %4 = vector.shape_cast %3 : vector<1x8x32xf32> to vector<8x32xf32>
    %c0_3 = arith.constant 0 : index
    %c0_4 = arith.constant 0 : index
    %c0_5 = arith.constant 0 : index
    %5 = vector.load %arg2[%c0_3, %c0_4, %c0_5] : memref<1x8x32xf32, #tpu.memory_space<vmem>>, vector<1x8x32xf32>
    %6 = vector.shape_cast %5 : vector<1x8x32xf32> to vector<8x32xf32>
    %7 = arith.truncf %6 : vector<8x32xf32> to vector<8x32xbf16>
    %c0_6 = arith.constant 0 : index
    %c0_7 = arith.constant 0 : index
    %8 = vector.load %arg6[%c0_6, %c0_7] : memref<32x32xbf16, #tpu.memory_space<vmem>>, vector<32x32xbf16>
    %cst = arith.constant dense<0.000000e+00> : vector<8x32xf32>
    %9 = tpu.matmul %7, %8, %cst {dimension_numbers = #tpu.dot_dimension_numbers<[1], [0], [0], [1], [0, 0, 1, 1], [], []>} : vector<8x32xbf16>, vector<32x32xbf16>, vector<8x32xf32> -> vector<8x32xf32>
    %c0_8 = arith.constant 0 : index
    %c0_9 = arith.constant 0 : index
    %10 = vector.load %arg7[%c0_8, %c0_9] : memref<1x32xf32, #tpu.memory_space<vmem>>, vector<1x32xf32>
    %11 = vector.broadcast %10 : vector<1x32xf32> to vector<8x32xf32>
    %12 = arith.addf %9, %11 : vector<8x32xf32>
    %13 = vector.extract_strided_slice %12 {offsets = [0, 0], sizes = [8, 8], strides = [1, 1]} : vector<8x32xf32> to vector<8x8xf32>
    %14 = arith.truncf %13 : vector<8x8xf32> to vector<8x8xbf16>
    %c0_10 = arith.constant 0 : index
    %c0_11 = arith.constant 0 : index
    %c0_12 = arith.constant 0 : index
    %15 = vector.load %arg25[%c0_10, %c0_11, %c0_12] : memref<4x8x8xbf16, #tpu.memory_space<vmem>>, vector<1x8x8xbf16>
    %16 = vector.shape_cast %15 : vector<1x8x8xbf16> to vector<8x8xbf16>
    %17 = vector.shape_cast %14 : vector<8x8xbf16> to vector<1x8x8xbf16>
    tpu.vector_store %arg25[%c0_10, %c0_11, %c0_12], %17 {strides = array<i32>} : memref<4x8x8xbf16, #tpu.memory_space<vmem>>, vector<1x8x8xbf16>,
    %18 = vector.extract_strided_slice %12 {offsets = [0, 8], sizes = [8, 8], strides = [1, 1]} : vector<8x32xf32> to vector<8x8xf32>
    %19 = arith.truncf %18 : vector<8x8xf32> to vector<8x8xbf16>
    %c1 = arith.constant 1 : index
    %c0_13 = arith.constant 0 : index
    %c0_14 = arith.constant 0 : index
    %20 = vector.load %arg25[%c1, %c0_13, %c0_14] : memref<4x8x8xbf16, #tpu.memory_space<vmem>>, vector<1x8x8xbf16>
    %21 = vector.shape_cast %20 : vector<1x8x8xbf16> to vector<8x8xbf16>
    %22 = vector.shape_cast %19 : vector<8x8xbf16> to vector<1x8x8xbf16>
    tpu.vector_store %arg25[%c1, %c0_13, %c0_14], %22 {strides = array<i32>} : memref<4x8x8xbf16, #tpu.memory_space<vmem>>, vector<1x8x8xbf16>,
    %23 = vector.extract_strided_slice %12 {offsets = [0, 16], sizes = [8, 8], strides = [1, 1]} : vector<8x32xf32> to vector<8x8xf32>
    %24 = arith.truncf %23 : vector<8x8xf32> to vector<8x8xbf16>
    %c2 = arith.constant 2 : index
    %c0_15 = arith.constant 0 : index
    %c0_16 = arith.constant 0 : index
    %25 = vector.load %arg25[%c2, %c0_15, %c0_16] : memref<4x8x8xbf16, #tpu.memory_space<vmem>>, vector<1x8x8xbf16>
    %26 = vector.shape_cast %25 : vector<1x8x8xbf16> to vector<8x8xbf16>
    %27 = vector.shape_cast %24 : vector<8x8xbf16> to vector<1x8x8xbf16>
    tpu.vector_store %arg25[%c2, %c0_15, %c0_16], %27 {strides = array<i32>} : memref<4x8x8xbf16, #tpu.memory_space<vmem>>, vector<1x8x8xbf16>,
    %28 = vector.extract_strided_slice %12 {offsets = [0, 24], sizes = [8, 8], strides = [1, 1]} : vector<8x32xf32> to vector<8x8xf32>
    %29 = arith.truncf %28 : vector<8x8xf32> to vector<8x8xbf16>
    %c3 = arith.constant 3 : index
    %c0_17 = arith.constant 0 : index
    %c0_18 = arith.constant 0 : index
    %30 = vector.load %arg25[%c3, %c0_17, %c0_18] : memref<4x8x8xbf16, #tpu.memory_space<vmem>>, vector<1x8x8xbf16>
    %31 = vector.shape_cast %30 : vector<1x8x8xbf16> to vector<8x8xbf16>
    %32 = vector.shape_cast %29 : vector<8x8xbf16> to vector<1x8x8xbf16>
    tpu.vector_store %arg25[%c3, %c0_17, %c0_18], %32 {strides = array<i32>} : memref<4x8x8xbf16, #tpu.memory_space<vmem>>, vector<1x8x8xbf16>,
    %c0_19 = arith.constant 0 : index
    %c0_20 = arith.constant 0 : index
    %c0_21 = arith.constant 0 : index
    %33 = vector.load %arg25[%c0_19, %c0_20, %c0_21] : memref<4x8x8xbf16, #tpu.memory_space<vmem>>, vector<4x8x8xbf16>
    %c0_22 = arith.constant 0 : index
    %c0_23 = arith.constant 0 : index
    %c0_24 = arith.constant 0 : index
    %34 = vector.load %arg23[%c0_22, %c0_23, %c0_24] : memref<4x8x8xbf16, #tpu.memory_space<vmem>>, vector<4x8x8xbf16>
    "tpu.trace_start"() <{level = 10 : i32, message = "hqd,hkd->hqk"}> : () -> ()
    %cst_25 = arith.constant dense<0.000000e+00> : vector<4x8x8xf32>
    %35 = tpu.matmul %33, %34, %cst_25 {dimension_numbers = #tpu.dot_dimension_numbers<[2], [2], [1], [1], [0, 0, 0, 1, 1, 1], [0], [0]>} : vector<4x8x8xbf16>, vector<4x8x8xbf16>, vector<4x8x8xf32> -> vector<4x8x8xf32>
    "tpu.trace_stop"() : () -> ()
    %c0_26 = arith.constant 0 : index
    %c0_27 = arith.constant 0 : index
    %c0_28 = arith.constant 0 : index
    %36 = vector.load %arg5[%c0_26, %c0_27, %c0_28] : memref<1x8x8xf32, #tpu.memory_space<vmem>>, vector<1x8x8xf32>
    %37 = vector.shape_cast %36 : vector<1x8x8xf32> to vector<8x8xf32>
    %38 = vector.shape_cast %37 : vector<8x8xf32> to vector<1x8x8xf32>
    %39 = vector.broadcast %38 : vector<1x8x8xf32> to vector<4x8x8xf32>
    %40 = arith.addf %35, %39 : vector<4x8x8xf32>
    %cst_29 = arith.constant dense<0xFF800000> : vector<4x8xf32>
    %41 = vector.multi_reduction <maximumf>, %40, %cst_29 [2] : vector<4x8x8xf32> to vector<4x8xf32>
    %42 = vector.shape_cast %41 : vector<4x8xf32> to vector<4x8x1xf32>
    %43 = vector.broadcast %42 : vector<4x8x1xf32> to vector<4x8x8xf32>
    %44 = arith.subf %40, %43 : vector<4x8x8xf32>
    %45 = math.exp %44 : vector<4x8x8xf32>
    %cst_30 = arith.constant dense<0.000000e+00> : vector<4x8xf32>
    %46 = vector.multi_reduction <add>, %45, %cst_30 [2] : vector<4x8x8xf32> to vector<4x8xf32>
    %47 = vector.shape_cast %46 : vector<4x8xf32> to vector<4x8x1xf32>
    %48 = arith.truncf %45 : vector<4x8x8xf32> to vector<4x8x8xbf16>
    %c0_31 = arith.constant 0 : index
    %c0_32 = arith.constant 0 : index
    %c0_33 = arith.constant 0 : index
    %49 = vector.load %arg24[%c0_31, %c0_32, %c0_33] : memref<4x8x8xbf16, #tpu.memory_space<vmem>>, vector<4x8x8xbf16>
    "tpu.trace_start"() <{level = 10 : i32, message = "hqk,hkd->hqd"}> : () -> ()
    %cst_34 = arith.constant dense<0.000000e+00> : vector<4x8x8xf32>
    %50 = tpu.matmul %48, %49, %cst_34 {dimension_numbers = #tpu.dot_dimension_numbers<[2], [1], [1], [2], [0, 0, 0, 1, 1, 2], [0], [0]>} : vector<4x8x8xbf16>, vector<4x8x8xbf16>, vector<4x8x8xf32> -> vector<4x8x8xf32>
    "tpu.trace_stop"() : () -> ()
    %51 = tpu.reciprocal %47 {approx = true} : vector<4x8x1xf32> -> vector<4x8x1xf32>
    %52 = vector.broadcast %51 : vector<4x8x1xf32> to vector<4x8x8xf32>
    %53 = arith.mulf %50, %52 : vector<4x8x8xf32>
    %54 = vector.extract_strided_slice %53 {offsets = [0, 0, 0], sizes = [1, 8, 8], strides = [1, 1, 1]} : vector<4x8x8xf32> to vector<1x8x8xf32>
    %55 = vector.shape_cast %54 : vector<1x8x8xf32> to vector<8x8xf32>
    %c0_35 = arith.constant 0 : index
    %c0_36 = arith.constant 0 : index
    %56 = vector.load %arg26[%c0_35, %c0_36] : memref<8x32xf32, #tpu.memory_space<vmem>>, vector<8x8xf32>
    tpu.vector_store %arg26[%c0_35, %c0_36], %55 {strides = array<i32>} : memref<8x32xf32, #tpu.memory_space<vmem>>, vector<8x8xf32>,
    %57 = vector.extract_strided_slice %53 {offsets = [1, 0, 0], sizes = [1, 8, 8], strides = [1, 1, 1]} : vector<4x8x8xf32> to vector<1x8x8xf32>
    %58 = vector.shape_cast %57 : vector<1x8x8xf32> to vector<8x8xf32>
    %c0_37 = arith.constant 0 : index
    %c8 = arith.constant 8 : index
    %59 = vector.load %arg26[%c0_37, %c8] : memref<8x32xf32, #tpu.memory_space<vmem>>, vector<8x8xf32>
    tpu.vector_store %arg26[%c0_37, %c8], %58 {strides = array<i32>} : memref<8x32xf32, #tpu.memory_space<vmem>>, vector<8x8xf32>,
    %60 = vector.extract_strided_slice %53 {offsets = [2, 0, 0], sizes = [1, 8, 8], strides = [1, 1, 1]} : vector<4x8x8xf32> to vector<1x8x8xf32>
    %61 = vector.shape_cast %60 : vector<1x8x8xf32> to vector<8x8xf32>
    %c0_38 = arith.constant 0 : index
    %c16 = arith.constant 16 : index
    %62 = vector.load %arg26[%c0_38, %c16] : memref<8x32xf32, #tpu.memory_space<vmem>>, vector<8x8xf32>
    tpu.vector_store %arg26[%c0_38, %c16], %61 {strides = array<i32>} : memref<8x32xf32, #tpu.memory_space<vmem>>, vector<8x8xf32>,
    %63 = vector.extract_strided_slice %53 {offsets = [3, 0, 0], sizes = [1, 8, 8], strides = [1, 1, 1]} : vector<4x8x8xf32> to vector<1x8x8xf32>
    %64 = vector.shape_cast %63 : vector<1x8x8xf32> to vector<8x8xf32>
    %c0_39 = arith.constant 0 : index
    %c24 = arith.constant 24 : index
    %65 = vector.load %arg26[%c0_39, %c24] : memref<8x32xf32, #tpu.memory_space<vmem>>, vector<8x8xf32>
    tpu.vector_store %arg26[%c0_39, %c24], %64 {strides = array<i32>} : memref<8x32xf32, #tpu.memory_space<vmem>>, vector<8x8xf32>,
    %c0_40 = arith.constant 0 : index
    %c0_41 = arith.constant 0 : index
    %66 = vector.load %arg26[%c0_40, %c0_41] : memref<8x32xf32, #tpu.memory_space<vmem>>, vector<8x32xf32>
    %67 = arith.truncf %66 : vector<8x32xf32> to vector<8x32xbf16>
    %c0_42 = arith.constant 0 : index
    %c0_43 = arith.constant 0 : index
    %68 = vector.load %arg12[%c0_42, %c0_43] : memref<32x32xbf16, #tpu.memory_space<vmem>>, vector<32x32xbf16>
    %cst_44 = arith.constant dense<0.000000e+00> : vector<8x32xf32>
    %69 = tpu.matmul %67, %68, %cst_44 {dimension_numbers = #tpu.dot_dimension_numbers<[1], [0], [0], [1], [0, 0, 1, 1], [], []>} : vector<8x32xbf16>, vector<32x32xbf16>, vector<8x32xf32> -> vector<8x32xf32>
    %c0_45 = arith.constant 0 : index
    %c0_46 = arith.constant 0 : index
    %70 = vector.load %arg13[%c0_45, %c0_46] : memref<1x32xf32, #tpu.memory_space<vmem>>, vector<1x32xf32>
    %71 = vector.broadcast %70 : vector<1x32xf32> to vector<8x32xf32>
    %72 = arith.addf %69, %71 : vector<8x32xf32>
    %73 = arith.addf %72, %4 : vector<8x32xf32>
    %cst_47 = arith.constant dense<0.000000e+00> : vector<8xf32>
    %74 = vector.multi_reduction <add>, %73, %cst_47 [1] : vector<8x32xf32> to vector<8xf32>
    %75 = vector.shape_cast %74 : vector<8xf32> to vector<8x1xf32>
    %cst_48 = arith.constant 3.200000e+01 : f32
    %76 = vector.broadcast %cst_48 : f32 to vector<8x1xf32>
    %77 = arith.divf %75, %76 : vector<8x1xf32>
    %78 = vector.broadcast %77 : vector<8x1xf32> to vector<8x32xf32>
    %79 = arith.subf %73, %78 : vector<8x32xf32>
    %80 = arith.mulf %79, %79 : vector<8x32xf32>
    %cst_49 = arith.constant dense<0.000000e+00> : vector<8xf32>
    %81 = vector.multi_reduction <add>, %80, %cst_49 [1] : vector<8x32xf32> to vector<8xf32>
    %82 = vector.shape_cast %81 : vector<8xf32> to vector<8x1xf32>
    %cst_50 = arith.constant 3.200000e+01 : f32
    %83 = vector.broadcast %cst_50 : f32 to vector<8x1xf32>
    %84 = arith.divf %82, %83 : vector<8x1xf32>
    %85 = vector.broadcast %77 : vector<8x1xf32> to vector<8x32xf32>
    %86 = arith.subf %73, %85 : vector<8x32xf32>
    %cst_51 = arith.constant 9.99999974E-6 : f32
    %87 = vector.broadcast %cst_51 : f32 to vector<8x1xf32>
    %88 = arith.addf %84, %87 : vector<8x1xf32>
    %89 = math.rsqrt %88 : vector<8x1xf32>
    %90 = vector.broadcast %89 : vector<8x1xf32> to vector<8x32xf32>
    %91 = arith.mulf %86, %90 : vector<8x32xf32>
    %c0_52 = arith.constant 0 : index
    %c0_53 = arith.constant 0 : index
    %92 = vector.load %arg14[%c0_52, %c0_53] : memref<1x32xf32, #tpu.memory_space<vmem>>, vector<1x32xf32>
    %93 = vector.broadcast %92 : vector<1x32xf32> to vector<8x32xf32>
    %94 = arith.mulf %91, %93 : vector<8x32xf32>
    %c0_54 = arith.constant 0 : index
    %c0_55 = arith.constant 0 : index
    %95 = vector.load %arg15[%c0_54, %c0_55] : memref<1x32xf32, #tpu.memory_space<vmem>>, vector<1x32xf32>
    %96 = vector.broadcast %95 : vector<1x32xf32> to vector<8x32xf32>
    %97 = arith.addf %94, %96 : vector<8x32xf32>
    %98 = arith.truncf %97 : vector<8x32xf32> to vector<8x32xbf16>
    %c0_56 = arith.constant 0 : index
    %c0_57 = arith.constant 0 : index
    %99 = vector.load %arg16[%c0_56, %c0_57] : memref<32x64xbf16, #tpu.memory_space<vmem>>, vector<32x64xbf16>
    %cst_58 = arith.constant dense<0.000000e+00> : vector<8x64xf32>
    %100 = tpu.matmul %98, %99, %cst_58 {dimension_numbers = #tpu.dot_dimension_numbers<[1], [0], [0], [1], [0, 0, 1, 1], [], []>} : vector<8x32xbf16>, vector<32x64xbf16>, vector<8x64xf32> -> vector<8x64xf32>
    %c0_59 = arith.constant 0 : index
    %c0_60 = arith.constant 0 : index
    %101 = vector.load %arg17[%c0_59, %c0_60] : memref<1x64xf32, #tpu.memory_space<vmem>>, vector<1x64xf32>
    %102 = vector.broadcast %101 : vector<1x64xf32> to vector<8x64xf32>
    %103 = arith.addf %100, %102 : vector<8x64xf32>
    %cst_61 = arith.constant 0.000000e+00 : f32
    %104 = vector.broadcast %cst_61 : f32 to vector<8x64xf32>
    %105 = arith.cmpf ogt, %103, %104 : vector<8x64xf32>
    %cst_62 = arith.constant 0.00999999977 : f32
    %106 = vector.broadcast %cst_62 : f32 to vector<8x64xf32>
    %107 = arith.mulf %106, %103 : vector<8x64xf32>
    %108 = arith.select %105, %103, %107 : vector<8x64xi1>, vector<8x64xf32>
    %109 = arith.truncf %108 : vector<8x64xf32> to vector<8x64xbf16>
    %c0_63 = arith.constant 0 : index
    %c0_64 = arith.constant 0 : index
    %110 = vector.load %arg18[%c0_63, %c0_64] : memref<64x32xbf16, #tpu.memory_space<vmem>>, vector<64x32xbf16>
    %cst_65 = arith.constant dense<0.000000e+00> : vector<8x32xf32>
    %111 = tpu.matmul %109, %110, %cst_65 {dimension_numbers = #tpu.dot_dimension_numbers<[1], [0], [0], [1], [0, 0, 1, 1], [], []>} : vector<8x64xbf16>, vector<64x32xbf16>, vector<8x32xf32> -> vector<8x32xf32>
    %c0_66 = arith.constant 0 : index
    %c0_67 = arith.constant 0 : index
    %112 = vector.load %arg19[%c0_66, %c0_67] : memref<1x32xf32, #tpu.memory_space<vmem>>, vector<1x32xf32>
    %113 = vector.broadcast %112 : vector<1x32xf32> to vector<8x32xf32>
    %114 = arith.addf %111, %113 : vector<8x32xf32>
    %115 = arith.addf %114, %97 : vector<8x32xf32>
    %cst_68 = arith.constant dense<0.000000e+00> : vector<8xf32>
    %116 = vector.multi_reduction <add>, %115, %cst_68 [1] : vector<8x32xf32> to vector<8xf32>
    %117 = vector.shape_cast %116 : vector<8xf32> to vector<8x1xf32>
    %cst_69 = arith.constant 3.200000e+01 : f32
    %118 = vector.broadcast %cst_69 : f32 to vector<8x1xf32>
    %119 = arith.divf %117, %118 : vector<8x1xf32>
    %120 = vector.broadcast %119 : vector<8x1xf32> to vector<8x32xf32>
    %121 = arith.subf %115, %120 : vector<8x32xf32>
    %122 = arith.mulf %121, %121 : vector<8x32xf32>
    %cst_70 = arith.constant dense<0.000000e+00> : vector<8xf32>
    %123 = vector.multi_reduction <add>, %122, %cst_70 [1] : vector<8x32xf32> to vector<8xf32>
    %124 = vector.shape_cast %123 : vector<8xf32> to vector<8x1xf32>
    %cst_71 = arith.constant 3.200000e+01 : f32
    %125 = vector.broadcast %cst_71 : f32 to vector<8x1xf32>
    %126 = arith.divf %124, %125 : vector<8x1xf32>
    %127 = vector.broadcast %119 : vector<8x1xf32> to vector<8x32xf32>
    %128 = arith.subf %115, %127 : vector<8x32xf32>
    %cst_72 = arith.constant 9.99999974E-6 : f32
    %129 = vector.broadcast %cst_72 : f32 to vector<8x1xf32>
    %130 = arith.addf %126, %129 : vector<8x1xf32>
    %131 = math.rsqrt %130 : vector<8x1xf32>
    %132 = vector.broadcast %131 : vector<8x1xf32> to vector<8x32xf32>
    %133 = arith.mulf %128, %132 : vector<8x32xf32>
    %c0_73 = arith.constant 0 : index
    %c0_74 = arith.constant 0 : index
    %134 = vector.load %arg20[%c0_73, %c0_74] : memref<1x32xf32, #tpu.memory_space<vmem>>, vector<1x32xf32>
    %135 = vector.broadcast %134 : vector<1x32xf32> to vector<8x32xf32>
    %136 = arith.mulf %133, %135 : vector<8x32xf32>
    %c0_75 = arith.constant 0 : index
    %c0_76 = arith.constant 0 : index
    %137 = vector.load %arg21[%c0_75, %c0_76] : memref<1x32xf32, #tpu.memory_space<vmem>>, vector<1x32xf32>
    %138 = vector.broadcast %137 : vector<1x32xf32> to vector<8x32xf32>
    %139 = arith.addf %136, %138 : vector<8x32xf32>
    %c0_77 = arith.constant 0 : index
    %c0_78 = arith.constant 0 : index
    %c0_79 = arith.constant 0 : index
    %140 = vector.load %arg22[%c0_77, %c0_78, %c0_79] : memref<1x8x32xf32, #tpu.memory_space<vmem>>, vector<1x8x32xf32>
    %141 = vector.shape_cast %140 : vector<1x8x32xf32> to vector<8x32xf32>
    %142 = vector.shape_cast %139 : vector<8x32xf32> to vector<1x8x32xf32>
    tpu.vector_store %arg22[%c0_77, %c0_78, %c0_79], %142 {strides = array<i32>} : memref<1x8x32xf32, #tpu.memory_space<vmem>>, vector<1x8x32xf32>,
    return
  }
  func.func @transform_0(%arg0: i32, %arg1: i32) -> (i32, i32, i32) {
    %c0_i32 = arith.constant 0 : i32
    %c0_i32_0 = arith.constant 0 : i32
    return %arg0, %arg1, %c0_i32 : i32, i32, i32
  }
  func.func @transform_1(%arg0: i32, %arg1: i32) -> (i32, i32, i32) {
    %c0_i32 = arith.constant 0 : i32
    %c0_i32_0 = arith.constant 0 : i32
    %c0_i32_1 = arith.constant 0 : i32
    return %arg0, %c0_i32, %c0_i32_0 : i32, i32, i32
  }
  func.func @transform_2(%arg0: i32, %arg1: i32) -> (i32, i32, i32) {
    %c0_i32 = arith.constant 0 : i32
    %c0_i32_0 = arith.constant 0 : i32
    %c0_i32_1 = arith.constant 0 : i32
    return %arg0, %c0_i32, %c0_i32_0 : i32, i32, i32
  }
  func.func @transform_3(%arg0: i32, %arg1: i32) -> (i32, i32, i32) {
    %c0_i32 = arith.constant 0 : i32
    %c0_i32_0 = arith.constant 0 : i32
    return %arg0, %arg1, %c0_i32 : i32, i32, i32
  }
  func.func @transform_4(%arg0: i32, %arg1: i32) -> (i32, i32) {
    %c0_i32 = arith.constant 0 : i32
    %c0_i32_0 = arith.constant 0 : i32
    %c0_i32_1 = arith.constant 0 : i32
    return %c0_i32, %c0_i32_0 : i32, i32
  }
  func.func @transform_5(%arg0: i32, %arg1: i32) -> (i32, i32) {
    %c0_i32 = arith.constant 0 : i32
    %c0_i32_0 = arith.constant 0 : i32
    %c0_i32_1 = arith.constant 0 : i32
    return %c0_i32, %c0_i32_0 : i32, i32
  }
  func.func @transform_6(%arg0: i32, %arg1: i32) -> (i32, i32) {
    %c0_i32 = arith.constant 0 : i32
    %c0_i32_0 = arith.constant 0 : i32
    %c0_i32_1 = arith.constant 0 : i32
    return %c0_i32, %c0_i32_0 : i32, i32
  }
  func.func @transform_7(%arg0: i32, %arg1: i32) -> (i32, i32) {
    %c0_i32 = arith.constant 0 : i32
    %c0_i32_0 = arith.constant 0 : i32
    %c0_i32_1 = arith.constant 0 : i32
    return %c0_i32, %c0_i32_0 : i32, i32
  }
  func.func @transform_8(%arg0: i32, %arg1: i32) -> (i32, i32) {
    %c0_i32 = arith.constant 0 : i32
    %c0_i32_0 = arith.constant 0 : i32
    %c0_i32_1 = arith.constant 0 : i32
    return %c0_i32, %c0_i32_0 : i32, i32
  }
  func.func @transform_9(%arg0: i32, %arg1: i32) -> (i32, i32) {
    %c0_i32 = arith.constant 0 : i32
    %c0_i32_0 = arith.constant 0 : i32
    %c0_i32_1 = arith.constant 0 : i32
    return %c0_i32, %c0_i32_0 : i32, i32
  }
  func.func @transform_10(%arg0: i32, %arg1: i32) -> (i32, i32) {
    %c0_i32 = arith.constant 0 : i32
    %c0_i32_0 = arith.constant 0 : i32
    %c0_i32_1 = arith.constant 0 : i32
    return %c0_i32, %c0_i32_0 : i32, i32
  }
  func.func @transform_11(%arg0: i32, %arg1: i32) -> (i32, i32) {
    %c0_i32 = arith.constant 0 : i32
    %c0_i32_0 = arith.constant 0 : i32
    %c0_i32_1 = arith.constant 0 : i32
    return %c0_i32, %c0_i32_0 : i32, i32
  }
  func.func @transform_12(%arg0: i32, %arg1: i32) -> (i32, i32) {
    %c0_i32 = arith.constant 0 : i32
    %c0_i32_0 = arith.constant 0 : i32
    %c0_i32_1 = arith.constant 0 : i32
    return %c0_i32, %c0_i32_0 : i32, i32
  }
  func.func @transform_13(%arg0: i32, %arg1: i32) -> (i32, i32) {
    %c0_i32 = arith.constant 0 : i32
    %c0_i32_0 = arith.constant 0 : i32
    %c0_i32_1 = arith.constant 0 : i32
    return %c0_i32, %c0_i32_0 : i32, i32
  }
  func.func @transform_14(%arg0: i32, %arg1: i32) -> (i32, i32) {
    %c0_i32 = arith.constant 0 : i32
    %c0_i32_0 = arith.constant 0 : i32
    %c0_i32_1 = arith.constant 0 : i32
    return %c0_i32, %c0_i32_0 : i32, i32
  }
  func.func @transform_15(%arg0: i32, %arg1: i32) -> (i32, i32) {
    %c0_i32 = arith.constant 0 : i32
    %c0_i32_0 = arith.constant 0 : i32
    %c0_i32_1 = arith.constant 0 : i32
    return %c0_i32, %c0_i32_0 : i32, i32
  }
  func.func @transform_16(%arg0: i32, %arg1: i32) -> (i32, i32) {
    %c0_i32 = arith.constant 0 : i32
    %c0_i32_0 = arith.constant 0 : i32
    %c0_i32_1 = arith.constant 0 : i32
    return %c0_i32, %c0_i32_0 : i32, i32
  }
  func.func @transform_17(%arg0: i32, %arg1: i32) -> (i32, i32) {
    %c0_i32 = arith.constant 0 : i32
    %c0_i32_0 = arith.constant 0 : i32
    %c0_i32_1 = arith.constant 0 : i32
    return %c0_i32, %c0_i32_0 : i32, i32
  }
  func.func @transform_18(%arg0: i32, %arg1: i32) -> (i32, i32) {
    %c0_i32 = arith.constant 0 : i32
    %c0_i32_0 = arith.constant 0 : i32
    %c0_i32_1 = arith.constant 0 : i32
    return %c0_i32, %c0_i32_0 : i32, i32
  }
  func.func @transform_19(%arg0: i32, %arg1: i32) -> (i32, i32) {
    %c0_i32 = arith.constant 0 : i32
    %c0_i32_0 = arith.constant 0 : i32
    %c0_i32_1 = arith.constant 0 : i32
    return %c0_i32, %c0_i32_0 : i32, i32
  }
  func.func @transform_20(%arg0: i32, %arg1: i32) -> (i32, i32, i32) {
    %c0_i32 = arith.constant 0 : i32
    %c0_i32_0 = arith.constant 0 : i32
    return %arg0, %arg1, %c0_i32 : i32, i32, i32
  }
}

</mosaic_0001>

<llo_original>
// kernel: transformer_block.1
$region0: #{transformer_block.1}
  #allocation0 [shape = 'u32[]', space=smem, size = 0x4, offset = 0x4, fixed_abs, tag = 'smem constant byte address 0x4 - core index']
  #allocation1 [shape = 'u32[144,128]{1,0:T(1,128)}', space=vmem, size = 0x12000, scoped, tag = 'internal scratch']
  #allocation2 [shape = 'bf16[4,8,8]{2,1,0:T(8,128)(2,1)}', space=vmem, size = 0x2000, scoped, tag = 'scratch operand']
  #allocation3 [shape = 'bf16[4,8,8]{2,1,0:T(8,128)(2,1)}', space=vmem, size = 0x2000, scoped, tag = 'scratch operand']
  #allocation4 [shape = 'bf16[4,8,8]{2,1,0:T(8,128)(2,1)}', space=vmem, size = 0x2000, scoped, tag = 'scratch operand']
  #allocation5 [shape = 'f32[8,32]{1,0:T(8,128)}', space=vmem, size = 0x1000, scoped, tag = 'scratch operand']
  %s0 = inlined_call_operand.vmem [shape: f32[2,8,32], index: 0, kind: input, shape index: {}]
  %s1 = inlined_call_operand.vmem [shape: f32[2,8,32], index: 1, kind: input, shape index: {}]
  %s2 = inlined_call_operand.vmem [shape: f32[2,8,32], index: 2, kind: input, shape index: {}]
  %s3 = inlined_call_operand.vmem [shape: f32[2,8,8], index: 3, kind: input, shape index: {}]
  %s4 = inlined_call_operand.vmem [shape: bf16[32,32], index: 4, kind: input, shape index: {}]
  %s5 = inlined_call_operand.vmem [shape: f32[1,32], index: 5, kind: input, shape index: {}]
  %s6 = inlined_call_operand.vmem [shape: bf16[32,32], index: 6, kind: input, shape index: {}]
  %s7 = inlined_call_operand.hbm [shape: f32[1,32], index: 7, kind: input, shape index: {}]
  %s8 = inlined_call_operand.vmem [shape: bf16[32,32], index: 8, kind: input, shape index: {}]
  %s9 = inlined_call_operand.hbm [shape: f32[1,32], index: 9, kind: input, shape index: {}]
  %s10 = inlined_call_operand.vmem [shape: bf16[32,32], index: 10, kind: input, shape index: {}]
  %s11 = inlined_call_operand.hbm [shape: f32[1,32], index: 11, kind: input, shape index: {}]
  %s12 = inlined_call_operand.hbm [shape: f32[1,32], index: 12, kind: input, shape index: {}]
  %s13 = inlined_call_operand.hbm [shape: f32[1,32], index: 13, kind: input, shape index: {}]
  %s14 = inlined_call_operand.hbm [shape: bf16[32,64], index: 14, kind: input, shape index: {}]
  %s15 = inlined_call_operand.hbm [shape: f32[1,64], index: 15, kind: input, shape index: {}]
  %s16 = inlined_call_operand.vmem [shape: bf16[64,32], index: 16, kind: input, shape index: {}]
  %s17 = inlined_call_operand.hbm [shape: f32[1,32], index: 17, kind: input, shape index: {}]
  %s18 = inlined_call_operand.hbm [shape: f32[1,32], index: 18, kind: input, shape index: {}]
  %s19 = inlined_call_operand.hbm [shape: f32[1,32], index: 19, kind: input, shape index: {}]
  %s20 = inlined_call_operand.hbm [shape: f32[2,8,32], index: 20, kind: output, shape index: {}]
  %s21 = sld [smem:[#allocation0]]
  $region157: #{transformer_block.1} parent=0
    _
  %s23 = ssub.s32 1, %s21
  %s24 = scalar_select 0, %s23, %s21
  $region1: #{transformer_block.1} parent=0
    #allocation6 [shape = 'u8[512]{0}', space=vmem, size = 0x400, scoped, tag = 'input window, operand 7, single buffered']
    #allocation7 [shape = 's32[2]{0}', space=sflag, size = 0x8, scoped, tag = 'scoped memory for transformer_block.1']
    #allocation8 [shape = 's32[2]{0}', space=sflag, size = 0x8, scoped, tag = 'scoped memory for transformer_block.1']
    #allocation9 [shape = 'u8[512]{0}', space=vmem, size = 0x400, scoped, tag = 'input window, operand 9, single buffered']
    #allocation10 [shape = 's32[1]{0}', space=sflag, size = 0x4, scoped, tag = 'scoped memory for transformer_block.1']
    #allocation11 [shape = 'u8[512]{0}', space=vmem, size = 0x400, scoped, tag = 'input window, operand 11, single buffered']
    #allocation12 [shape = 'u8[512]{0}', space=vmem, size = 0x400, scoped, tag = 'input window, operand 12, single buffered']
    #allocation13 [shape = 's32[1]{0}', space=sflag, size = 0x4, scoped, tag = 'scoped memory for transformer_block.1']
    #allocation14 [shape = 'u8[512]{0}', space=vmem, size = 0x400, scoped, tag = 'input window, operand 13, single buffered']
    #allocation15 [shape = 'u8[8192]{0}', space=vmem, size = 0x2000, scoped, tag = 'input window, operand 14, single buffered']
    #allocation16 [shape = 's32[1]{0}', space=sflag, size = 0x4, scoped, tag = 'scoped memory for transformer_block.1']
    #allocation17 [shape = 'u8[512]{0}', space=vmem, size = 0x400, scoped, tag = 'input window, operand 15, single buffered']
    #allocation18 [shape = 'u8[512]{0}', space=vmem, size = 0x400, scoped, tag = 'input window, operand 17, single buffered']
    #allocation19 [shape = 's32[1]{0}', space=sflag, size = 0x4, scoped, tag = 'scoped memory for transformer_block.1']
    #allocation20 [shape = 'u8[512]{0}', space=vmem, size = 0x400, scoped, tag = 'input window, operand 18, single buffered']
    #allocation21 [shape = 'u8[512]{0}', space=vmem, size = 0x400, scoped, tag = 'input window, operand 19, single buffered']
    #allocation22 [shape = 's32[1]{0}', space=sflag, size = 0x4, scoped, tag = 'scoped memory for transformer_block.1']
    #allocation23 [shape = 'u8[8192]{0}', space=vmem, size = 0x2000, scoped, tag = 'output window, operand 0']
    %25 = vsyncpa [#allocation7], 0
    %26 = vsyncpa [#allocation10], 0
    %27 = vsyncpa [#allocation13], 0
    %28 = vsyncpa [#allocation16], 0
    %29 = vsyncpa [#allocation19], 0
    %30 = vsyncpa [#allocation22], 0
    %31 = vsyncpa [#allocation8], 0
    %s32 = scalar_lea.sflag [#allocation8], 1
    %33 = vsyncpa %s32, 0
    loop: start=0, step=1, limit=4
    $region2: #{transformer_block.1} parent=1 // loop_pre_header
      _
    $region3: #{transformer_block.1} parent=1 // loop_header
      %s35 = sphi 0, %s39
      %p36 = scmp.ge.s32.totalorder %s35, 4
      %s42 = sphi 0, %s54
      %s43 = sphi 0, %s50
      %s44 = sphi 0, %s42
      %s45 = sphi 0, %s43
      %s46 = sphi 0, %s44
      %s47 = sphi 0, %s45
      %s59 = sphi 0, %s61
      %s62 = sphi 0, %s59
      %s63 = sphi 0, %s62
      %s79 = sphi 0, %s63
      %s85 = sphi 0, %s87
      %s88 = sphi 0, %s85
      %s89 = sphi 0, %s88
      %s105 = sphi 0, %s89
      %s111 = sphi 0, %s113
      %s114 = sphi 0, %s111
      %s115 = sphi 0, %s114
      %s131 = sphi 0, %s115
      %s139 = sphi 0, %s141
      %s142 = sphi 0, %s139
      %s143 = sphi 0, %s142
      %s159 = sphi 0, %s143
      %s163 = sphi 0, %s163
      %s165 = sphi 0, %s163
      %s166 = sphi 0, %s165
      %s180 = sphi 0, %s166
      %s184 = sphi 0, %s184
      %s186 = sphi 0, %s184
      %s187 = sphi 0, %s186
      %s201 = sphi 0, %s187
      %s205 = sphi 0, %s205
      %s207 = sphi 0, %s205
      %s208 = sphi 0, %s207
      %s222 = sphi 0, %s208
      %s226 = sphi 0, %s226
      %s228 = sphi 0, %s226
      %s229 = sphi 0, %s228
      %s243 = sphi 0, %s229
      %s247 = sphi 0, %s247
      %s249 = sphi 0, %s247
      %s250 = sphi 0, %s249
      %s264 = sphi 0, %s250
      %s268 = sphi 0, %s268
      %s270 = sphi 0, %s268
      %s271 = sphi 0, %s270
      %s285 = sphi 0, %s271
      %s289 = sphi 0, %s289
      %s291 = sphi 0, %s289
      %s292 = sphi 0, %s291
      %s306 = sphi 0, %s292
      %s310 = sphi 0, %s310
      %s312 = sphi 0, %s310
      %s313 = sphi 0, %s312
      %s327 = sphi 0, %s313
      %s331 = sphi 0, %s331
      %s333 = sphi 0, %s331
      %s334 = sphi 0, %s333
      %s348 = sphi 0, %s334
      %s352 = sphi 0, %s352
      %s354 = sphi 0, %s352
      %s355 = sphi 0, %s354
      %s369 = sphi 0, %s355
      %s373 = sphi 0, %s373
      %s375 = sphi 0, %s373
      %s376 = sphi 0, %s375
      %s390 = sphi 0, %s376
      %s394 = sphi 0, %s394
      %s396 = sphi 0, %s394
      %s397 = sphi 0, %s396
      %s411 = sphi 0, %s397
      %s415 = sphi 0, %s415
      %s417 = sphi 0, %s415
      %s418 = sphi 0, %s417
      %s432 = sphi 0, %s418
      %s436 = sphi 0, %s436
      %s438 = sphi 0, %s436
      %s439 = sphi 0, %s438
      %s453 = sphi 0, %s439
      %s457 = sphi 0, %s457
      %s459 = sphi 0, %s457
      %s460 = sphi 0, %s459
      %s474 = sphi 0, %s460
      %s478 = sphi 0, %s478
      %s480 = sphi 0, %s478
      %s481 = sphi 0, %s480
      %s495 = sphi 0, %s481
      %s503 = sphi 0, %s505
      %s506 = sphi 0, %s503
      %s507 = sphi 0, %s506
      %s523 = sphi 0, %s507
    $region4: #{transformer_block.1} parent=1 // loop_header_branch
      %38 = sbr.rel (%p36) target = $region8
    $region5: #{transformer_block.1} parent=1 // loop_body
      %s40 = ssub.s32 %s35, 1
      %s41 = ssub.s32 %s35, 2
      %s48 = sadd.s32 1, %s43
      %p49 = scmp.ge.s32.totalorder %s48, 1
      %s50 = scalar_select %p49, 0, %s48
      %s51 = sadd.s32 1, %s42
      %s52 = scalar_select %p49, %s51, %s42
      %p53 = scmp.ge.s32.totalorder %s52, 2
      %s54 = scalar_select %p53, 0, %s52
      %s55 = ssub.s32 %s42, %s54
      %s56 = ssub.s32 %s43, %s50
      %s57 = sor.u32 %s55, %s56
      %p58 = scmp.eq.s32.totalorder %s57, 0
      %s60 = sadd.s32 %s59, 1
      %s61 = scalar_select %p58, %s59, %s60
      %p64 = pneg %p58
      %p65 = scmp.eq.s32.totalorder %s35, 1
      %p66 = por %p64, %p65
      %p67 = scmp.ne.s32.totalorder %s59, %s62
      %p68 = scmp.eq.s32.totalorder %s35, 0
      %p69 = por %p67, %p68
      %p70 = scmp.ne.s32.totalorder %s59, %s62
      %p71 = scmp.eq.s32.totalorder %s40, 1
      %p72 = por %p70, %p71
      %p73 = scmp.ne.s32.totalorder %s62, %s63
      %p74 = scmp.eq.s32.totalorder %s40, 0
      %p75 = por %p73, %p74
      %p76 = scmp.ne.s32.totalorder %s62, %s63
      %p77 = scmp.eq.s32.totalorder %s41, 1
      %p78 = por %p76, %p77
      %p80 = scmp.ne.s32.totalorder %s63, %s79
      %p81 = scmp.eq.s32.totalorder %s41, 0
      %p82 = por %p80, %p81
      %s83 = ssub.s32 %s42, %s54
      %p84 = scmp.eq.s32.totalorder %s83, 0
      %s86 = sadd.s32 %s85, 1
      %s87 = scalar_select %p84, %s85, %s86
      %p90 = pneg %p84
      %p91 = scmp.eq.s32.totalorder %s35, 1
      %p92 = por %p90, %p91
      %p93 = scmp.ne.s32.totalorder %s85, %s88
      %p94 = scmp.eq.s32.totalorder %s35, 0
      %p95 = por %p93, %p94
      %p96 = scmp.ne.s32.totalorder %s85, %s88
      %p97 = scmp.eq.s32.totalorder %s40, 1
      %p98 = por %p96, %p97
      %p99 = scmp.ne.s32.totalorder %s88, %s89
      %p100 = scmp.eq.s32.totalorder %s40, 0
      %p101 = por %p99, %p100
      %p102 = scmp.ne.s32.totalorder %s88, %s89
      %p103 = scmp.eq.s32.totalorder %s41, 1
      %p104 = por %p102, %p103
      %p106 = scmp.ne.s32.totalorder %s89, %s105
      %p107 = scmp.eq.s32.totalorder %s41, 0
      %p108 = por %p106, %p107
      %s109 = ssub.s32 %s42, %s54
      %p110 = scmp.eq.s32.totalorder %s109, 0
      %s112 = sadd.s32 %s111, 1
      %s113 = scalar_select %p110, %s111, %s112
      %p116 = pneg %p110
      %p117 = scmp.eq.s32.totalorder %s35, 1
      %p118 = por %p116, %p117
      %p119 = scmp.ne.s32.totalorder %s111, %s114
      %p120 = scmp.eq.s32.totalorder %s35, 0
      %p121 = por %p119, %p120
      %p122 = scmp.ne.s32.totalorder %s111, %s114
      %p123 = scmp.eq.s32.totalorder %s40, 1
      %p124 = por %p122, %p123
      %p125 = scmp.ne.s32.totalorder %s114, %s115
      %p126 = scmp.eq.s32.totalorder %s40, 0
      %p127 = por %p125, %p126
      %p128 = scmp.ne.s32.totalorder %s114, %s115
      %p129 = scmp.eq.s32.totalorder %s41, 1
      %p130 = por %p128, %p129
      %p132 = scmp.ne.s32.totalorder %s115, %s131
      %p133 = scmp.eq.s32.totalorder %s41, 0
      %p134 = por %p132, %p133
      %s135 = ssub.s32 %s42, %s54
      %s136 = ssub.s32 %s43, %s50
      %s137 = sor.u32 %s135, %s136
      %p138 = scmp.eq.s32.totalorder %s137, 0
      %s140 = sadd.s32 %s139, 1
      %s141 = scalar_select %p138, %s139, %s140
      %p144 = pneg %p138
      %p145 = scmp.eq.s32.totalorder %s35, 1
      %p146 = por %p144, %p145
      %p147 = scmp.ne.s32.totalorder %s139, %s142
      %p148 = scmp.eq.s32.totalorder %s35, 0
      %p149 = por %p147, %p148
      %p150 = scmp.ne.s32.totalorder %s139, %s142
      %p151 = scmp.eq.s32.totalorder %s40, 1
      %p152 = por %p150, %p151
      %p153 = scmp.ne.s32.totalorder %s142, %s143
      %p154 = scmp.eq.s32.totalorder %s40, 0
      %p155 = por %p153, %p154
      %p156 = scmp.ne.s32.totalorder %s142, %s143
      %p157 = scmp.eq.s32.totalorder %s41, 1
      %p158 = por %p156, %p157
      %p160 = scmp.ne.s32.totalorder %s143, %s159
      %p161 = scmp.eq.s32.totalorder %s41, 0
      %p162 = por %p160, %p161
      %s164 = sadd.s32 %s163, 1
      %p167 = scmp.eq.s32.totalorder %s35, 1
      %p168 = scmp.ne.s32.totalorder %s163, %s165
      %p169 = scmp.eq.s32.totalorder %s35, 0
      %p170 = por %p168, %p169
      %p171 = scmp.ne.s32.totalorder %s163, %s165
      %p172 = scmp.eq.s32.totalorder %s40, 1
      %p173 = por %p171, %p172
      %p174 = scmp.ne.s32.totalorder %s165, %s166
      %p175 = scmp.eq.s32.totalorder %s40, 0
      %p176 = por %p174, %p175
      %p177 = scmp.ne.s32.totalorder %s165, %s166
      %p178 = scmp.eq.s32.totalorder %s41, 1
      %p179 = por %p177, %p178
      %p181 = scmp.ne.s32.totalorder %s166, %s180
      %p182 = scmp.eq.s32.totalorder %s41, 0
      %p183 = por %p181, %p182
      %s185 = sadd.s32 %s184, 1
      %p188 = scmp.eq.s32.totalorder %s35, 1
      %p189 = scmp.ne.s32.totalorder %s184, %s186
      %p190 = scmp.eq.s32.totalorder %s35, 0
      %p191 = por %p189, %p190
      %p192 = scmp.ne.s32.totalorder %s184, %s186
      %p193 = scmp.eq.s32.totalorder %s40, 1
      %p194 = por %p192, %p193
      %p195 = scmp.ne.s32.totalorder %s186, %s187
      %p196 = scmp.eq.s32.totalorder %s40, 0
      %p197 = por %p195, %p196
      %p198 = scmp.ne.s32.totalorder %s186, %s187
      %p199 = scmp.eq.s32.totalorder %s41, 1
      %p200 = por %p198, %p199
      %p202 = scmp.ne.s32.totalorder %s187, %s201
      %p203 = scmp.eq.s32.totalorder %s41, 0
      %p204 = por %p202, %p203
      %s206 = sadd.s32 %s205, 1
      %p209 = scmp.eq.s32.totalorder %s35, 1
      %p210 = scmp.ne.s32.totalorder %s205, %s207
      %p211 = scmp.eq.s32.totalorder %s35, 0
      %p212 = por %p210, %p211
      %p213 = scmp.ne.s32.totalorder %s205, %s207
      %p214 = scmp.eq.s32.totalorder %s40, 1
      %p215 = por %p213, %p214
      %p216 = scmp.ne.s32.totalorder %s207, %s208
      %p217 = scmp.eq.s32.totalorder %s40, 0
      %p218 = por %p216, %p217
      %p219 = scmp.ne.s32.totalorder %s207, %s208
      %p220 = scmp.eq.s32.totalorder %s41, 1
      %p221 = por %p219, %p220
      %p223 = scmp.ne.s32.totalorder %s208, %s222
      %p224 = scmp.eq.s32.totalorder %s41, 0
      %p225 = por %p223, %p224
      %s227 = sadd.s32 %s226, 1
      %p230 = scmp.eq.s32.totalorder %s35, 1
      %p231 = scmp.ne.s32.totalorder %s226, %s228
      %p232 = scmp.eq.s32.totalorder %s35, 0
      %p233 = por %p231, %p232
      %p234 = scmp.ne.s32.totalorder %s226, %s228
      %p235 = scmp.eq.s32.totalorder %s40, 1
      %p236 = por %p234, %p235
      %p237 = scmp.ne.s32.totalorder %s228, %s229
      %p238 = scmp.eq.s32.totalorder %s40, 0
      %p239 = por %p237, %p238
      %p240 = scmp.ne.s32.totalorder %s228, %s229
      %p241 = scmp.eq.s32.totalorder %s41, 1
      %p242 = por %p240, %p241
      %p244 = scmp.ne.s32.totalorder %s229, %s243
      %p245 = scmp.eq.s32.totalorder %s41, 0
      %p246 = por %p244, %p245
      %s248 = sadd.s32 %s247, 1
      %p251 = scmp.eq.s32.totalorder %s35, 1
      %p252 = scmp.ne.s32.totalorder %s247, %s249
      %p253 = scmp.eq.s32.totalorder %s35, 0
      %p254 = por %p252, %p253
      %p255 = scmp.ne.s32.totalorder %s247, %s249
      %p256 = scmp.eq.s32.totalorder %s40, 1
      %p257 = por %p255, %p256
      %p258 = scmp.ne.s32.totalorder %s249, %s250
      %p259 = scmp.eq.s32.totalorder %s40, 0
      %p260 = por %p258, %p259
      %p261 = scmp.ne.s32.totalorder %s249, %s250
      %p262 = scmp.eq.s32.totalorder %s41, 1
      %p263 = por %p261, %p262
      %p265 = scmp.ne.s32.totalorder %s250, %s264
      %p266 = scmp.eq.s32.totalorder %s41, 0
      %p267 = por %p265, %p266
      %s269 = sadd.s32 %s268, 1
      %p272 = scmp.eq.s32.totalorder %s35, 1
      %p273 = scmp.ne.s32.totalorder %s268, %s270
      %p274 = scmp.eq.s32.totalorder %s35, 0
      %p275 = por %p273, %p274
      %p276 = scmp.ne.s32.totalorder %s268, %s270
      %p277 = scmp.eq.s32.totalorder %s40, 1
      %p278 = por %p276, %p277
      %p279 = scmp.ne.s32.totalorder %s270, %s271
      %p280 = scmp.eq.s32.totalorder %s40, 0
      %p281 = por %p279, %p280
      %p282 = scmp.ne.s32.totalorder %s270, %s271
      %p283 = scmp.eq.s32.totalorder %s41, 1
      %p284 = por %p282, %p283
      %p286 = scmp.ne.s32.totalorder %s271, %s285
      %p287 = scmp.eq.s32.totalorder %s41, 0
      %p288 = por %p286, %p287
      %s290 = sadd.s32 %s289, 1
      %p293 = scmp.eq.s32.totalorder %s35, 1
      %p294 = scmp.ne.s32.totalorder %s289, %s291
      %p295 = scmp.eq.s32.totalorder %s35, 0
      %p296 = por %p294, %p295
      %p297 = scmp.ne.s32.totalorder %s289, %s291
      %p298 = scmp.eq.s32.totalorder %s40, 1
      %p299 = por %p297, %p298
      %p300 = scmp.ne.s32.totalorder %s291, %s292
      %p301 = scmp.eq.s32.totalorder %s40, 0
      %p302 = por %p300, %p301
      %p303 = scmp.ne.s32.totalorder %s291, %s292
      %p304 = scmp.eq.s32.totalorder %s41, 1
      %p305 = por %p303, %p304
      %p307 = scmp.ne.s32.totalorder %s292, %s306
      %p308 = scmp.eq.s32.totalorder %s41, 0
      %p309 = por %p307, %p308
      %s311 = sadd.s32 %s310, 1
      %p314 = scmp.eq.s32.totalorder %s35, 1
      %p315 = scmp.ne.s32.totalorder %s310, %s312
      %p316 = scmp.eq.s32.totalorder %s35, 0
      %p317 = por %p315, %p316
      %p318 = scmp.ne.s32.totalorder %s310, %s312
      %p319 = scmp.eq.s32.totalorder %s40, 1
      %p320 = por %p318, %p319
      %p321 = scmp.ne.s32.totalorder %s312, %s313
      %p322 = scmp.eq.s32.totalorder %s40, 0
      %p323 = por %p321, %p322
      %p324 = scmp.ne.s32.totalorder %s312, %s313
      %p325 = scmp.eq.s32.totalorder %s41, 1
      %p326 = por %p324, %p325
      %p328 = scmp.ne.s32.totalorder %s313, %s327
      %p329 = scmp.eq.s32.totalorder %s41, 0
      %p330 = por %p328, %p329
      %s332 = sadd.s32 %s331, 1
      %p335 = scmp.eq.s32.totalorder %s35, 1
      %p336 = scmp.ne.s32.totalorder %s331, %s333
      %p337 = scmp.eq.s32.totalorder %s35, 0
      %p338 = por %p336, %p337
      %p339 = scmp.ne.s32.totalorder %s331, %s333
      %p340 = scmp.eq.s32.totalorder %s40, 1
      %p341 = por %p339, %p340
      %p342 = scmp.ne.s32.totalorder %s333, %s334
      %p343 = scmp.eq.s32.totalorder %s40, 0
      %p344 = por %p342, %p343
      %p345 = scmp.ne.s32.totalorder %s333, %s334
      %p346 = scmp.eq.s32.totalorder %s41, 1
      %p347 = por %p345, %p346
      %p349 = scmp.ne.s32.totalorder %s334, %s348
      %p350 = scmp.eq.s32.totalorder %s41, 0
      %p351 = por %p349, %p350
      %s353 = sadd.s32 %s352, 1
      %p356 = scmp.eq.s32.totalorder %s35, 1
      %p357 = scmp.ne.s32.totalorder %s352, %s354
      %p358 = scmp.eq.s32.totalorder %s35, 0
      %p359 = por %p357, %p358
      %p360 = scmp.ne.s32.totalorder %s352, %s354
      %p361 = scmp.eq.s32.totalorder %s40, 1
      %p362 = por %p360, %p361
      %p363 = scmp.ne.s32.totalorder %s354, %s355
      %p364 = scmp.eq.s32.totalorder %s40, 0
      %p365 = por %p363, %p364
      %p366 = scmp.ne.s32.totalorder %s354, %s355
      %p367 = scmp.eq.s32.totalorder %s41, 1
      %p368 = por %p366, %p367
      %p370 = scmp.ne.s32.totalorder %s355, %s369
      %p371 = scmp.eq.s32.totalorder %s41, 0
      %p372 = por %p370, %p371
      %s374 = sadd.s32 %s373, 1
      %p377 = scmp.eq.s32.totalorder %s35, 1
      %p378 = scmp.ne.s32.totalorder %s373, %s375
      %p379 = scmp.eq.s32.totalorder %s35, 0
      %p380 = por %p378, %p379
      %p381 = scmp.ne.s32.totalorder %s373, %s375
      %p382 = scmp.eq.s32.totalorder %s40, 1
      %p383 = por %p381, %p382
      %p384 = scmp.ne.s32.totalorder %s375, %s376
      %p385 = scmp.eq.s32.totalorder %s40, 0
      %p386 = por %p384, %p385
      %p387 = scmp.ne.s32.totalorder %s375, %s376
      %p388 = scmp.eq.s32.totalorder %s41, 1
      %p389 = por %p387, %p388
      %p391 = scmp.ne.s32.totalorder %s376, %s390
      %p392 = scmp.eq.s32.totalorder %s41, 0
      %p393 = por %p391, %p392
      %s395 = sadd.s32 %s394, 1
      %p398 = scmp.eq.s32.totalorder %s35, 1
      %p399 = scmp.ne.s32.totalorder %s394, %s396
      %p400 = scmp.eq.s32.totalorder %s35, 0
      %p401 = por %p399, %p400
      %p402 = scmp.ne.s32.totalorder %s394, %s396
      %p403 = scmp.eq.s32.totalorder %s40, 1
      %p404 = por %p402, %p403
      %p405 = scmp.ne.s32.totalorder %s396, %s397
      %p406 = scmp.eq.s32.totalorder %s40, 0
      %p407 = por %p405, %p406
      %p408 = scmp.ne.s32.totalorder %s396, %s397
      %p409 = scmp.eq.s32.totalorder %s41, 1
      %p410 = por %p408, %p409
      %p412 = scmp.ne.s32.totalorder %s397, %s411
      %p413 = scmp.eq.s32.totalorder %s41, 0
      %p414 = por %p412, %p413
      %s416 = sadd.s32 %s415, 1
      %p419 = scmp.eq.s32.totalorder %s35, 1
      %p420 = scmp.ne.s32.totalorder %s415, %s417
      %p421 = scmp.eq.s32.totalorder %s35, 0
      %p422 = por %p420, %p421
      %p423 = scmp.ne.s32.totalorder %s415, %s417
      %p424 = scmp.eq.s32.totalorder %s40, 1
      %p425 = por %p423, %p424
      %p426 = scmp.ne.s32.totalorder %s417, %s418
      %p427 = scmp.eq.s32.totalorder %s40, 0
      %p428 = por %p426, %p427
      %p429 = scmp.ne.s32.totalorder %s417, %s418
      %p430 = scmp.eq.s32.totalorder %s41, 1
      %p431 = por %p429, %p430
      %p433 = scmp.ne.s32.totalorder %s418, %s432
      %p434 = scmp.eq.s32.totalorder %s41, 0
      %p435 = por %p433, %p434
      %s437 = sadd.s32 %s436, 1
      %p440 = scmp.eq.s32.totalorder %s35, 1
      %p441 = scmp.ne.s32.totalorder %s436, %s438
      %p442 = scmp.eq.s32.totalorder %s35, 0
      %p443 = por %p441, %p442
      %p444 = scmp.ne.s32.totalorder %s436, %s438
      %p445 = scmp.eq.s32.totalorder %s40, 1
      %p446 = por %p444, %p445
      %p447 = scmp.ne.s32.totalorder %s438, %s439
      %p448 = scmp.eq.s32.totalorder %s40, 0
      %p449 = por %p447, %p448
      %p450 = scmp.ne.s32.totalorder %s438, %s439
      %p451 = scmp.eq.s32.totalorder %s41, 1
      %p452 = por %p450, %p451
      %p454 = scmp.ne.s32.totalorder %s439, %s453
      %p455 = scmp.eq.s32.totalorder %s41, 0
      %p456 = por %p454, %p455
      %s458 = sadd.s32 %s457, 1
      %p461 = scmp.eq.s32.totalorder %s35, 1
      %p462 = scmp.ne.s32.totalorder %s457, %s459
      %p463 = scmp.eq.s32.totalorder %s35, 0
      %p464 = por %p462, %p463
      %p465 = scmp.ne.s32.totalorder %s457, %s459
      %p466 = scmp.eq.s32.totalorder %s40, 1
      %p467 = por %p465, %p466
      %p468 = scmp.ne.s32.totalorder %s459, %s460
      %p469 = scmp.eq.s32.totalorder %s40, 0
      %p470 = por %p468, %p469
      %p471 = scmp.ne.s32.totalorder %s459, %s460
      %p472 = scmp.eq.s32.totalorder %s41, 1
      %p473 = por %p471, %p472
      %p475 = scmp.ne.s32.totalorder %s460, %s474
      %p476 = scmp.eq.s32.totalorder %s41, 0
      %p477 = por %p475, %p476
      %s479 = sadd.s32 %s478, 1
      %p482 = scmp.eq.s32.totalorder %s35, 1
      %p483 = scmp.ne.s32.totalorder %s478, %s480
      %p484 = scmp.eq.s32.totalorder %s35, 0
      %p485 = por %p483, %p484
      %p486 = scmp.ne.s32.totalorder %s478, %s480
      %p487 = scmp.eq.s32.totalorder %s40, 1
      %p488 = por %p486, %p487
      %p489 = scmp.ne.s32.totalorder %s480, %s481
      %p490 = scmp.eq.s32.totalorder %s40, 0
      %p491 = por %p489, %p490
      %p492 = scmp.ne.s32.totalorder %s480, %s481
      %p493 = scmp.eq.s32.totalorder %s41, 1
      %p494 = por %p492, %p493
      %p496 = scmp.ne.s32.totalorder %s481, %s495
      %p497 = scmp.eq.s32.totalorder %s41, 0
      %p498 = por %p496, %p497
      %s499 = ssub.s32 %s42, %s54
      %s500 = ssub.s32 %s43, %s50
      %s501 = sor.u32 %s499, %s500
      %p502 = scmp.eq.s32.totalorder %s501, 0
      %s504 = sadd.s32 %s503, 1
      %s505 = scalar_select %p502, %s503, %s504
      %p508 = pneg %p502
      %p509 = scmp.eq.s32.totalorder %s35, 1
      %p510 = por %p508, %p509
      %p511 = scmp.ne.s32.totalorder %s503, %s506
      %p512 = scmp.eq.s32.totalorder %s35, 0
      %p513 = por %p511, %p512
      %p514 = scmp.ne.s32.totalorder %s503, %s506
      %p515 = scmp.eq.s32.totalorder %s40, 1
      %p516 = por %p514, %p515
      %p517 = scmp.ne.s32.totalorder %s506, %s507
      %p518 = scmp.eq.s32.totalorder %s40, 0
      %p519 = por %p517, %p518
      %p520 = scmp.ne.s32.totalorder %s506, %s507
      %p521 = scmp.eq.s32.totalorder %s41, 1
      %p522 = por %p520, %p521
      %p524 = scmp.ne.s32.totalorder %s507, %s523
      %p525 = scmp.eq.s32.totalorder %s41, 0
      %p526 = por %p524, %p525
      %p527 = scmp.le.s32.totalorder 1, %s35
      %p528 = scmp.lt.s32.totalorder %s35, 3
      %p529 = pnand %p527, %p528
      %p530 = pneg %p529
      // Predicated region
      $region9: #{transformer_block.1} parent=5 // pred_check
        _
      $region10: #{transformer_block.1} parent=5 // pred_check_branch
        %532 = sbr.rel (%p529) target = $region12
      $region11: #{transformer_block.1} parent=5 // pred_region
        %s533 = ssub.s32 %s35, 1
        // Predicated region
        $region13: #{transformer_block.1} parent=11 // pred_check
          %p534 = pneg %p176
        $region14: #{transformer_block.1} parent=11 // pred_check_branch
          %536 = sbr.rel (%p534) target = $region16
        $region15: #{transformer_block.1} parent=11 // pred_region
          _
        $region16: #{transformer_block.1} parent=11 // pred_fallthru
          _
        // Predicated region
        $region17: #{transformer_block.1} parent=11 // pred_check
          %p537 = pneg %p197
        $region18: #{transformer_block.1} parent=11 // pred_check_branch
          %539 = sbr.rel (%p537) target = $region20
        $region19: #{transformer_block.1} parent=11 // pred_region
          _
        $region20: #{transformer_block.1} parent=11 // pred_fallthru
          _
        // Predicated region
        $region21: #{transformer_block.1} parent=11 // pred_check
          %p540 = pneg %p218
        $region22: #{transformer_block.1} parent=11 // pred_check_branch
          %542 = sbr.rel (%p540) target = $region24
        $region23: #{transformer_block.1} parent=11 // pred_region
          _
        $region24: #{transformer_block.1} parent=11 // pred_fallthru
          _
        // Predicated region
        $region25: #{transformer_block.1} parent=11 // pred_check
          %p543 = pneg %p239
        $region26: #{transformer_block.1} parent=11 // pred_check_branch
          %545 = sbr.rel (%p543) target = $region28
        $region27: #{transformer_block.1} parent=11 // pred_region
          %s547 = ssub.s32 16, 16
          %548 = vsyncadd [#allocation7], %s547
          %s550 = sshll.u32 [#allocation6], 4
          %s551 = int_to_ptr.vmem [resolvable:$true] %s550
          %553 = dma.hbm_to_vmem [thread:$0]  %s7, 16, %s551, [#allocation7]
        $region28: #{transformer_block.1} parent=11 // pred_fallthru
          _
        // Predicated region
        $region29: #{transformer_block.1} parent=11 // pred_check
          %p554 = pneg %p260
        $region30: #{transformer_block.1} parent=11 // pred_check_branch
          %556 = sbr.rel (%p554) target = $region32
        $region31: #{transformer_block.1} parent=11 // pred_region
          _
        $region32: #{transformer_block.1} parent=11 // pred_fallthru
          _
        // Predicated region
        $region33: #{transformer_block.1} parent=11 // pred_check
          %p557 = pneg %p281
        $region34: #{transformer_block.1} parent=11 // pred_check_branch
          %559 = sbr.rel (%p557) target = $region36
        $region35: #{transformer_block.1} parent=11 // pred_region
          %s561 = ssub.s32 16, 16
          %562 = vsyncadd [#allocation10], %s561
          %s564 = sshll.u32 [#allocation9], 4
          %s565 = int_to_ptr.vmem [resolvable:$true] %s564
          %567 = dma.hbm_to_vmem [thread:$0]  %s9, 16, %s565, [#allocation10]
        $region36: #{transformer_block.1} parent=11 // pred_fallthru
          _
        // Predicated region
        $region37: #{transformer_block.1} parent=11 // pred_check
          %p568 = pneg %p302
        $region38: #{transformer_block.1} parent=11 // pred_check_branch
          %570 = sbr.rel (%p568) target = $region40
        $region39: #{transformer_block.1} parent=11 // pred_region
          _
        $region40: #{transformer_block.1} parent=11 // pred_fallthru
          _
        // Predicated region
        $region41: #{transformer_block.1} parent=11 // pred_check
          %p571 = pneg %p323
        $region42: #{transformer_block.1} parent=11 // pred_check_branch
          %573 = sbr.rel (%p571) target = $region44
        $region43: #{transformer_block.1} parent=11 // pred_region
          %s575 = ssub.s32 16, 16
          %576 = vsyncadd [#allocation10], %s575
          %s578 = sshll.u32 [#allocation11], 4
          %s579 = int_to_ptr.vmem [resolvable:$true] %s578
          %581 = dma.hbm_to_vmem [thread:$0]  %s11, 16, %s579, [#allocation10]
        $region44: #{transformer_block.1} parent=11 // pred_fallthru
          _
        // Predicated region
        $region45: #{transformer_block.1} parent=11 // pred_check
          %p582 = pneg %p344
        $region46: #{transformer_block.1} parent=11 // pred_check_branch
          %584 = sbr.rel (%p582) target = $region48
        $region47: #{transformer_block.1} parent=11 // pred_region
          %s586 = ssub.s32 16, 16
          %587 = vsyncadd [#allocation13], %s586
          %s589 = sshll.u32 [#allocation12], 4
          %s590 = int_to_ptr.vmem [resolvable:$true] %s589
          %592 = dma.hbm_to_vmem [thread:$0]  %s12, 16, %s590, [#allocation13]
        $region48: #{transformer_block.1} parent=11 // pred_fallthru
          _
        // Predicated region
        $region49: #{transformer_block.1} parent=11 // pred_check
          %p593 = pneg %p365
        $region50: #{transformer_block.1} parent=11 // pred_check_branch
          %595 = sbr.rel (%p593) target = $region52
        $region51: #{transformer_block.1} parent=11 // pred_region
          %s597 = ssub.s32 16, 16
          %598 = vsyncadd [#allocation13], %s597
          %s600 = sshll.u32 [#allocation14], 4
          %s601 = int_to_ptr.vmem [resolvable:$true] %s600
          %603 = dma.hbm_to_vmem [thread:$0]  %s13, 16, %s601, [#allocation13]
        $region52: #{transformer_block.1} parent=11 // pred_fallthru
          _
        // Predicated region
        $region53: #{transformer_block.1} parent=11 // pred_check
          %p604 = pneg %p386
        $region54: #{transformer_block.1} parent=11 // pred_check_branch
          %606 = sbr.rel (%p604) target = $region56
        $region55: #{transformer_block.1} parent=11 // pred_region
          %s608 = ssub.s32 256, 256
          %609 = vsyncadd [#allocation16], %s608
          %s610 = sshll.u32 [#allocation15], 4
          %s611 = int_to_ptr.vmem [resolvable:$true] %s610
          %616 = dma.hbm_to_vmem [thread:$0]  %s14, 256, %s611, [#allocation16], 64, 64, 4
        $region56: #{transformer_block.1} parent=11 // pred_fallthru
          _
        // Predicated region
        $region57: #{transformer_block.1} parent=11 // pred_check
          %p617 = pneg %p407
        $region58: #{transformer_block.1} parent=11 // pred_check_branch
          %619 = sbr.rel (%p617) target = $region60
        $region59: #{transformer_block.1} parent=11 // pred_region
          %s621 = ssub.s32 16, 16
          %622 = vsyncadd [#allocation16], %s621
          %s624 = sshll.u32 [#allocation17], 4
          %s625 = int_to_ptr.vmem [resolvable:$true] %s624
          %627 = dma.hbm_to_vmem [thread:$0]  %s15, 16, %s625, [#allocation16]
        $region60: #{transformer_block.1} parent=11 // pred_fallthru
          _
        // Predicated region
        $region61: #{transformer_block.1} parent=11 // pred_check
          %p628 = pneg %p428
        $region62: #{transformer_block.1} parent=11 // pred_check_branch
          %630 = sbr.rel (%p628) target = $region64
        $region63: #{transformer_block.1} parent=11 // pred_region
          _
        $region64: #{transformer_block.1} parent=11 // pred_fallthru
          _
        // Predicated region
        $region65: #{transformer_block.1} parent=11 // pred_check
          %p631 = pneg %p449
        $region66: #{transformer_block.1} parent=11 // pred_check_branch
          %633 = sbr.rel (%p631) target = $region68
        $region67: #{transformer_block.1} parent=11 // pred_region
          %s635 = ssub.s32 16, 16
          %636 = vsyncadd [#allocation19], %s635
          %s638 = sshll.u32 [#allocation18], 4
          %s639 = int_to_ptr.vmem [resolvable:$true] %s638
          %641 = dma.hbm_to_vmem [thread:$0]  %s17, 16, %s639, [#allocation19]
        $region68: #{transformer_block.1} parent=11 // pred_fallthru
          _
        // Predicated region
        $region69: #{transformer_block.1} parent=11 // pred_check
          %p642 = pneg %p470
        $region70: #{transformer_block.1} parent=11 // pred_check_branch
          %644 = sbr.rel (%p642) target = $region72
        $region71: #{transformer_block.1} parent=11 // pred_region
          %s646 = ssub.s32 16, 16
          %647 = vsyncadd [#allocation19], %s646
          %s649 = sshll.u32 [#allocation20], 4
          %s650 = int_to_ptr.vmem [resolvable:$true] %s649
          %652 = dma.hbm_to_vmem [thread:$0]  %s18, 16, %s650, [#allocation19]
        $region72: #{transformer_block.1} parent=11 // pred_fallthru
          _
        // Predicated region
        $region73: #{transformer_block.1} parent=11 // pred_check
          %p653 = pneg %p491
        $region74: #{transformer_block.1} parent=11 // pred_check_branch
          %655 = sbr.rel (%p653) target = $region76
        $region75: #{transformer_block.1} parent=11 // pred_region
          %s657 = ssub.s32 16, 16
          %658 = vsyncadd [#allocation22], %s657
          %s660 = sshll.u32 [#allocation21], 4
          %s661 = int_to_ptr.vmem [resolvable:$true] %s660
          %663 = dma.hbm_to_vmem [thread:$0]  %s19, 16, %s661, [#allocation22]
        $region76: #{transformer_block.1} parent=11 // pred_fallthru
          _
      $region12: #{transformer_block.1} parent=5 // pred_fallthru
        _
      %p664 = scmp.lt.s32.totalorder %s35, 2
      // Predicated region
      $region77: #{transformer_block.1} parent=5 // pred_check
        %p665 = pneg %p664
      $region78: #{transformer_block.1} parent=5 // pred_check_branch
        %667 = sbr.rel (%p665) target = $region80
      $region79: #{transformer_block.1} parent=5 // pred_region
        // Predicated region
        $region81: #{transformer_block.1} parent=79 // pred_check
          %p668 = pneg %p69
        $region82: #{transformer_block.1} parent=79 // pred_check_branch
          %670 = sbr.rel (%p668) target = $region84
        $region83: #{transformer_block.1} parent=79 // pred_region
          %p671 = scmp.lt.s32.totalorder %s42, 1
          %s672 = scalar_select %p671, %s42, 1
          %p673 = scmp.lt.s32.totalorder %s43, 0
          %s674 = scalar_select %p673, %s43, 0
          %s675 = sadd.s32 %s674, %s672
          %s676 = smul.addr %s675, 8
          %s677 = scalar_lea.vmem %s0, %s676
        $region84: #{transformer_block.1} parent=79 // pred_fallthru
          _
        // Predicated region
        $region85: #{transformer_block.1} parent=79 // pred_check
          %p678 = pneg %p95
        $region86: #{transformer_block.1} parent=79 // pred_check_branch
          %680 = sbr.rel (%p678) target = $region88
        $region87: #{transformer_block.1} parent=79 // pred_region
          %p681 = scmp.lt.s32.totalorder %s42, 1
          %s682 = scalar_select %p681, %s42, 1
          %s683 = smul.addr %s682, 8
          %s684 = scalar_lea.vmem %s1, %s683
        $region88: #{transformer_block.1} parent=79 // pred_fallthru
          _
        // Predicated region
        $region89: #{transformer_block.1} parent=79 // pred_check
          %p685 = pneg %p121
        $region90: #{transformer_block.1} parent=79 // pred_check_branch
          %687 = sbr.rel (%p685) target = $region92
        $region91: #{transformer_block.1} parent=79 // pred_region
          %p688 = scmp.lt.s32.totalorder %s42, 1
          %s689 = scalar_select %p688, %s42, 1
          %s690 = smul.addr %s689, 8
          %s691 = scalar_lea.vmem %s2, %s690
        $region92: #{transformer_block.1} parent=79 // pred_fallthru
          _
        // Predicated region
        $region93: #{transformer_block.1} parent=79 // pred_check
          %p692 = pneg %p149
        $region94: #{transformer_block.1} parent=79 // pred_check_branch
          %694 = sbr.rel (%p692) target = $region96
        $region95: #{transformer_block.1} parent=79 // pred_region
          %p695 = scmp.lt.s32.totalorder %s42, 1
          %s696 = scalar_select %p695, %s42, 1
          %p697 = scmp.lt.s32.totalorder %s43, 0
          %s698 = scalar_select %p697, %s43, 0
          %s699 = sadd.s32 %s698, %s696
          %s700 = smul.addr %s699, 8
          %s701 = scalar_lea.vmem %s3, %s700
        $region96: #{transformer_block.1} parent=79 // pred_fallthru
          _
      $region80: #{transformer_block.1} parent=5 // pred_fallthru
        _
      %p702 = scmp.le.s32.totalorder 1, %s35
      %p703 = scmp.lt.s32.totalorder %s35, 3
      %p704 = pnand %p702, %p703
      %p705 = pneg %p704
      // Predicated region
      $region97: #{transformer_block.1} parent=5 // pred_check
        _
      $region98: #{transformer_block.1} parent=5 // pred_check_branch
        %707 = sbr.rel (%p704) target = $region100
      $region99: #{transformer_block.1} parent=5 // pred_region
        %s708 = ssub.s32 %s35, 1
        // Predicated region
        $region101: #{transformer_block.1} parent=99 // pred_check
          %p709 = pneg %p239
        $region102: #{transformer_block.1} parent=99 // pred_check_branch
          %711 = sbr.rel (%p709) target = $region104
        $region103: #{transformer_block.1} parent=99 // pred_region
          %712 = dma.done [#allocation7], 16
        $region104: #{transformer_block.1} parent=99 // pred_fallthru
          _
        // Predicated region
        $region105: #{transformer_block.1} parent=99 // pred_check
          %p713 = pneg %p281
        $region106: #{transformer_block.1} parent=99 // pred_check_branch
          %715 = sbr.rel (%p713) target = $region108
        $region107: #{transformer_block.1} parent=99 // pred_region
          %716 = dma.done [#allocation10], 16
        $region108: #{transformer_block.1} parent=99 // pred_fallthru
          _
        // Predicated region
        $region109: #{transformer_block.1} parent=99 // pred_check
          %p717 = pneg %p323
        $region110: #{transformer_block.1} parent=99 // pred_check_branch
          %719 = sbr.rel (%p717) target = $region112
        $region111: #{transformer_block.1} parent=99 // pred_region
          %720 = dma.done [#allocation10], 16
        $region112: #{transformer_block.1} parent=99 // pred_fallthru
          _
        // Predicated region
        $region113: #{transformer_block.1} parent=99 // pred_check
          %p721 = pneg %p344
        $region114: #{transformer_block.1} parent=99 // pred_check_branch
          %723 = sbr.rel (%p721) target = $region116
        $region115: #{transformer_block.1} parent=99 // pred_region
          %724 = dma.done [#allocation13], 16
        $region116: #{transformer_block.1} parent=99 // pred_fallthru
          _
        // Predicated region
        $region117: #{transformer_block.1} parent=99 // pred_check
          %p725 = pneg %p365
        $region118: #{transformer_block.1} parent=99 // pred_check_branch
          %727 = sbr.rel (%p725) target = $region120
        $region119: #{transformer_block.1} parent=99 // pred_region
          %728 = dma.done [#allocation13], 16
        $region120: #{transformer_block.1} parent=99 // pred_fallthru
          _
        // Predicated region
        $region121: #{transformer_block.1} parent=99 // pred_check
          %p729 = pneg %p386
        $region122: #{transformer_block.1} parent=99 // pred_check_branch
          %731 = sbr.rel (%p729) target = $region124
        $region123: #{transformer_block.1} parent=99 // pred_region
          %732 = dma.done [#allocation16], 256
        $region124: #{transformer_block.1} parent=99 // pred_fallthru
          _
        // Predicated region
        $region125: #{transformer_block.1} parent=99 // pred_check
          %p733 = pneg %p407
        $region126: #{transformer_block.1} parent=99 // pred_check_branch
          %735 = sbr.rel (%p733) target = $region128
        $region127: #{transformer_block.1} parent=99 // pred_region
          %736 = dma.done [#allocation16], 16
        $region128: #{transformer_block.1} parent=99 // pred_fallthru
          _
        // Predicated region
        $region129: #{transformer_block.1} parent=99 // pred_check
          %p737 = pneg %p449
        $region130: #{transformer_block.1} parent=99 // pred_check_branch
          %739 = sbr.rel (%p737) target = $region132
        $region131: #{transformer_block.1} parent=99 // pred_region
          %740 = dma.done [#allocation19], 16
        $region132: #{transformer_block.1} parent=99 // pred_fallthru
          _
        // Predicated region
        $region133: #{transformer_block.1} parent=99 // pred_check
          %p741 = pneg %p470
        $region134: #{transformer_block.1} parent=99 // pred_check_branch
          %743 = sbr.rel (%p741) target = $region136
        $region135: #{transformer_block.1} parent=99 // pred_region
          %744 = dma.done [#allocation19], 16
        $region136: #{transformer_block.1} parent=99 // pred_fallthru
          _
        // Predicated region
        $region137: #{transformer_block.1} parent=99 // pred_check
          %p745 = pneg %p491
        $region138: #{transformer_block.1} parent=99 // pred_check_branch
          %747 = sbr.rel (%p745) target = $region140
        $region139: #{transformer_block.1} parent=99 // pred_region
          %748 = dma.done [#allocation22], 16
        $region140: #{transformer_block.1} parent=99 // pred_fallthru
          _
        %p749 = scmp.lt.s32.totalorder %s44, 1
        %s750 = scalar_select %p749, %s44, 1
        %p751 = scmp.lt.s32.totalorder %s45, 0
        %s752 = scalar_select %p751, %s45, 0
        %s753 = sadd.s32 %s752, %s750
        %s754 = smul.addr %s753, 8
        %s755 = scalar_lea.vmem %s0, %s754
        %p756 = pneg %p75
        %p757 = pneg %p72
        %p758 = scmp.lt.s32.totalorder %s44, 1
        %s759 = scalar_select %p758, %s44, 1
        %s760 = smul.addr %s759, 8
        %s761 = scalar_lea.vmem %s1, %s760
        %p762 = pneg %p101
        %p763 = pneg %p98
        %p764 = scmp.lt.s32.totalorder %s44, 1
        %s765 = scalar_select %p764, %s44, 1
        %s766 = smul.addr %s765, 8
        %s767 = scalar_lea.vmem %s2, %s766
        %p768 = pneg %p127
        %p769 = pneg %p124
        %p770 = scmp.lt.s32.totalorder %s44, 1
        %s771 = scalar_select %p770, %s44, 1
        %p772 = scmp.lt.s32.totalorder %s45, 0
        %s773 = scalar_select %p772, %s45, 0
        %s774 = sadd.s32 %s773, %s771
        %s775 = smul.addr %s774, 8
        %s776 = scalar_lea.vmem %s3, %s775
        %p777 = pneg %p155
        %p778 = pneg %p152
        %p779 = pneg %p176
        %p780 = pneg %p173
        %p781 = pneg %p197
        %p782 = pneg %p194
        %p783 = pneg %p218
        %p784 = pneg %p215
        %p785 = pneg %p239
        %p786 = pneg %p236
        %p787 = pneg %p260
        %p788 = pneg %p257
        %p789 = pneg %p281
        %p790 = pneg %p278
        %p791 = pneg %p302
        %p792 = pneg %p299
        %p793 = pneg %p323
        %p794 = pneg %p320
        %p795 = pneg %p344
        %p796 = pneg %p341
        %p797 = pneg %p365
        %p798 = pneg %p362
        %p799 = pneg %p386
        %p800 = pneg %p383
        %p801 = pneg %p407
        %p802 = pneg %p404
        %p803 = pneg %p428
        %p804 = pneg %p425
        %p805 = pneg %p449
        %p806 = pneg %p446
        %p807 = pneg %p470
        %p808 = pneg %p467
        %p809 = pneg %p491
        %p810 = pneg %p488
        %p811 = pneg %p519
        %p812 = pneg %p516
        %s813 = sand.u32 %s506, 1
        %s814 = scalar_lea.sflag [#allocation8], %s813
        %s815 = sand.u32 %s506, 1
        %s816 = smul.addr %s815, 8
        %s817 = scalar_lea.vmem [#allocation23], %s816
        %p818 = scmp.lt.s32.totalorder %s44, 1
        %s819 = scalar_select %p818, %s44, 1
        %p820 = scmp.lt.s32.totalorder %s45, 0
        %s821 = scalar_select %p820, %s45, 0
        %s822 = sadd.s32 %s821, %s819
        %s823 = smul.addr %s822, 8
        %s824 = scalar_lea.vmem %s0, %s823
        %p825 = scmp.lt.s32.totalorder %s44, 1
        %s826 = scalar_select %p825, %s44, 1
        %s827 = smul.addr %s826, 8
        %s828 = scalar_lea.vmem %s1, %s827
        %p829 = scmp.lt.s32.totalorder %s44, 1
        %s830 = scalar_select %p829, %s44, 1
        %s831 = smul.addr %s830, 8
        %s832 = scalar_lea.vmem %s2, %s831
        %p833 = scmp.lt.s32.totalorder %s44, 1
        %s834 = scalar_select %p833, %s44, 1
        %p835 = scmp.lt.s32.totalorder %s45, 0
        %s836 = scalar_select %p835, %s45, 0
        %s837 = sadd.s32 %s836, %s834
        %s838 = smul.addr %s837, 8
        %s839 = scalar_lea.vmem %s3, %s838
        %p841 = scmp.eq.s32.totalorder %s45, 0
        // Predicated region
        $region141: #{transformer_block.1} parent=99 // pred_check
          %p842 = pneg %p841
        $region142: #{transformer_block.1} parent=99 // pred_check_branch
          %844 = sbr.rel (%p842) target = $region144
        $region143: #{transformer_block.1} parent=99 // pred_region
          %v845 = vld [vmem:[%s828] sm:$0xff]
          %v846 = vpack.c.bf16 %v845, %v845
          %v847 = vld [vmem:[%s6] sm:$0xf]
          %v848 = vld [vmem:[%s6 + $0x4] sm:$0xf]
          %v849 = vld [vmem:[%s6 + $0x8] sm:$0xf]
          %v850 = vld [vmem:[%s6 + $0xc] sm:$0xf]
          %v851 = vld [vmem:[#allocation6] sm:$0x1]
          %v853 = vlaneseq
          %v854 = vshrl.u32 %v853, 7
          %v855 = vsub.s32 0, %v854
          %v856 = vrot.slane %v851, %v855
          %v862 = vunpack.c.l.b16 %v847
          %v863 = vunpack.c.l.b16 %v848
          %v864 = vunpack.c.l.b16 %v849
          %v865 = vunpack.c.l.b16 %v850
          %v866 = vpack.c.b16 %v863, %v862
          %v867 = vpack.c.b16 %v865, %v864
          %vm870 = vcmask 261120
          %v872 = vsel %vm870, %v846, 0
          %874 = vmatprep.subr.bf16.mxu0 0
          %875 = vmatpush1.bf16.msra.mxu0 %v866
          %876 = vmatprep.subr.bf16.mxu0 0
          %877 = vmatpush1.bf16.msra.mxu0 %v867
          %878 = vmatprep.subr.bf16.mxu0 0
          %879 = vmatpush1.bf16.msra.mxu0 0
          %880 = vmatprep.subr.bf16.mxu0 0
          %881 = vmatpush1.bf16.msra.mxu0 0
          %882 = vmatprep.subr.bf16.mxu0 0
          %883 = vmatpush1.bf16.msra.mxu0 0
          %884 = vmatprep.subr.bf16.mxu0 0
          %885 = vmatpush1.bf16.msra.mxu0 0
          %886 = vmatprep.subr.bf16.mxu0 0
          %887 = vmatpush1.bf16.msra.mxu0 0
          %888 = vmatprep.subr.bf16.mxu0 0
          %889 = vmatpush1.bf16.msra.mxu0 0
          %890 = vmatprep.subr.bf16.mxu0 0
          %891 = vmatpush1.bf16.msra.mxu0 0
          %892 = vmatprep.subr.bf16.mxu0 0
          %893 = vmatpush1.bf16.msra.mxu0 0
          %894 = vmatprep.subr.bf16.mxu0 0
          %895 = vmatpush1.bf16.msra.mxu0 0
          %896 = vmatprep.subr.bf16.mxu0 0
          %897 = vmatpush1.bf16.msra.mxu0 0
          %898 = vmatprep.subr.bf16.mxu0 0
          %899 = vmatpush1.bf16.msra.mxu0 0
          %900 = vmatprep.subr.bf16.mxu0 0
          %901 = vmatpush1.bf16.msra.mxu0 0
          %902 = vmatprep.subr.bf16.mxu0 0
          %903 = vmatpush1.bf16.msra.mxu0 0
          %904 = vmatprep.subr.bf16.mxu0 0
          %905 = vmatpush1.bf16.msra.mxu0 0
          %906 = vmatprep.mubr.bf16.mxu0 0
          %907 = vmatmul.mubr.bf16.gmra.mrb[0].mxu0 %v872
          %v908 = vpop.f32.mrb[0].mxu0
          %v909 = vadd.f32 %v856, %v908
          %v910 = vpop.f32.mrb[0].mxu0
          %v911 = vpop.f32.mrb[0].mxu0
          %v912 = vpop.f32.mrb[0].mxu0
          %913 = vdwg.mxu0
          %v914 = vld [vmem:[%s832] sm:$0xff]
          %v915 = vpack.c.bf16 %v914, %v914
          %v916 = vld [vmem:[%s8] sm:$0xf]
          %v917 = vld [vmem:[%s8 + $0x4] sm:$0xf]
          %v918 = vld [vmem:[%s8 + $0x8] sm:$0xf]
          %v919 = vld [vmem:[%s8 + $0xc] sm:$0xf]
          %v920 = vld [vmem:[#allocation9] sm:$0x1]
          %v922 = vlaneseq
          %v923 = vshrl.u32 %v922, 7
          %v924 = vsub.s32 0, %v923
          %v925 = vrot.slane %v920, %v924
          %v931 = vunpack.c.l.b16 %v916
          %v932 = vunpack.c.l.b16 %v917
          %v933 = vunpack.c.l.b16 %v918
          %v934 = vunpack.c.l.b16 %v919
          %v935 = vpack.c.b16 %v932, %v931
          %v936 = vpack.c.b16 %v934, %v933
          %v940 = vsel %vm870, %v915, 0
          %942 = vmatprep.subr.bf16.mxu0 0
          %943 = vmatpush1.bf16.msra.mxu0 %v935
          %944 = vmatprep.subr.bf16.mxu0 0
          %945 = vmatpush1.bf16.msra.mxu0 %v936
          %946 = vmatprep.subr.bf16.mxu0 0
          %947 = vmatpush1.bf16.msra.mxu0 0
          %948 = vmatprep.subr.bf16.mxu0 0
          %949 = vmatpush1.bf16.msra.mxu0 0
          %950 = vmatprep.subr.bf16.mxu0 0
          %951 = vmatpush1.bf16.msra.mxu0 0
          %952 = vmatprep.subr.bf16.mxu0 0
          %953 = vmatpush1.bf16.msra.mxu0 0
          %954 = vmatprep.subr.bf16.mxu0 0
          %955 = vmatpush1.bf16.msra.mxu0 0
          %956 = vmatprep.subr.bf16.mxu0 0
          %957 = vmatpush1.bf16.msra.mxu0 0
          %958 = vmatprep.subr.bf16.mxu0 0
          %959 = vmatpush1.bf16.msra.mxu0 0
          %960 = vmatprep.subr.bf16.mxu0 0
          %961 = vmatpush1.bf16.msra.mxu0 0
          %962 = vmatprep.subr.bf16.mxu0 0
          %963 = vmatpush1.bf16.msra.mxu0 0
          %964 = vmatprep.subr.bf16.mxu0 0
          %965 = vmatpush1.bf16.msra.mxu0 0
          %966 = vmatprep.subr.bf16.mxu0 0
          %967 = vmatpush1.bf16.msra.mxu0 0
          %968 = vmatprep.subr.bf16.mxu0 0
          %969 = vmatpush1.bf16.msra.mxu0 0
          %970 = vmatprep.subr.bf16.mxu0 0
          %971 = vmatpush1.bf16.msra.mxu0 0
          %972 = vmatprep.subr.bf16.mxu0 0
          %973 = vmatpush1.bf16.msra.mxu0 0
          %974 = vmatprep.mubr.bf16.mxu0 0
          %975 = vmatmul.mubr.bf16.gmra.mrb[0].mxu0 %v940
          %v976 = vpop.f32.mrb[0].mxu0
          %v977 = vadd.f32 %v925, %v976
          %v978 = vpop.f32.mrb[0].mxu0
          %v979 = vpop.f32.mrb[0].mxu0
          %v980 = vpop.f32.mrb[0].mxu0
          %981 = vdwg.mxu0
          %v982 = vpack.c.bf16 %v909, %v909
          %vm983 = vcmask 60416
          %984 = vst.msk [vmem:[#allocation2] sm:$0xf] %vm983, %v982
          %v985 = vpack.c.bf16 %v977, %v977
          %986 = vst.msk [vmem:[#allocation3] sm:$0xf] %vm983, %v985
          %v988 = vunpack.c.l.b16 %v982
          %v989 = vpack.c.b16 %v988, %v988
          %990 = vrot.lane.b32.xlu0 %v989, 120
          %v991 = vpop.permute.xlu0 %990
          %s993 = scalar_lea.vmem [#allocation2], 4
          %994 = vst.msk [vmem:[%s993] sm:$0xf] %vm983, %v991
          %v996 = vunpack.c.l.b16 %v985
          %v997 = vpack.c.b16 %v996, %v996
          %998 = vrot.lane.b32.xlu0 %v997, 120
          %v999 = vpop.permute.xlu0 %998
          %s1001 = scalar_lea.vmem [#allocation3], 4
          %1002 = vst.msk [vmem:[%s1001] sm:$0xf] %vm983, %v999
          %1003 = vrot.lane.b32.xlu0 %v989, 112
          %v1004 = vpop.permute.xlu0 %1003
          %s1006 = scalar_lea.vmem [#allocation2], 8
          %1007 = vst.msk [vmem:[%s1006] sm:$0xf] %vm983, %v1004
          %1008 = vrot.lane.b32.xlu0 %v997, 112
          %v1009 = vpop.permute.xlu0 %1008
          %s1011 = scalar_lea.vmem [#allocation3], 8
          %1012 = vst.msk [vmem:[%s1011] sm:$0xf] %vm983, %v1009
          %1013 = vrot.lane.b32.xlu0 %v989, 104
          %v1014 = vpop.permute.xlu0 %1013
          %s1016 = scalar_lea.vmem [#allocation2], 12
          %1017 = vst.msk [vmem:[%s1016] sm:$0xf] %vm983, %v1014
          %1018 = vrot.lane.b32.xlu0 %v997, 104
          %v1019 = vpop.permute.xlu0 %1018
          %s1021 = scalar_lea.vmem [#allocation3], 12
          %1022 = vst.msk [vmem:[%s1021] sm:$0xf] %vm983, %v1019
        $region144: #{transformer_block.1} parent=99 // pred_fallthru
          _
        %v1023 = vld [vmem:[%s824] sm:$0xff]
        %v1024 = vpack.c.bf16 %v1023, %v1023
        %v1025 = vld [vmem:[%s4] sm:$0xf]
        %v1026 = vld [vmem:[%s4 + $0x4] sm:$0xf]
        %v1027 = vld [vmem:[%s4 + $0x8] sm:$0xf]
        %v1028 = vld [vmem:[%s4 + $0xc] sm:$0xf]
        %v1029 = vld [vmem:[%s5] sm:$0x1]
        %v1031 = vlaneseq
        %v1032 = vshrl.u32 %v1031, 7
        %v1033 = vsub.s32 0, %v1032
        %v1034 = vrot.slane %v1029, %v1033
        %v1040 = vunpack.c.l.b16 %v1025
        %v1041 = vunpack.c.l.b16 %v1026
        %v1042 = vunpack.c.l.b16 %v1027
        %v1043 = vunpack.c.l.b16 %v1028
        %v1044 = vpack.c.b16 %v1041, %v1040
        %v1045 = vpack.c.b16 %v1043, %v1042
        %vm1048 = vcmask 261120
        %v1050 = vsel %vm1048, %v1024, 0
        %1052 = vmatprep.subr.bf16.mxu0 0
        %1053 = vmatpush1.bf16.msra.mxu0 %v1044
        %1054 = vmatprep.subr.bf16.mxu0 0
        %1055 = vmatpush1.bf16.msra.mxu0 %v1045
        %1056 = vmatprep.subr.bf16.mxu0 0
        %1057 = vmatpush1.bf16.msra.mxu0 0
        %1058 = vmatprep.subr.bf16.mxu0 0
        %1059 = vmatpush1.bf16.msra.mxu0 0
        %1060 = vmatprep.subr.bf16.mxu0 0
        %1061 = vmatpush1.bf16.msra.mxu0 0
        %1062 = vmatprep.subr.bf16.mxu0 0
        %1063 = vmatpush1.bf16.msra.mxu0 0
        %1064 = vmatprep.subr.bf16.mxu0 0
        %1065 = vmatpush1.bf16.msra.mxu0 0
        %1066 = vmatprep.subr.bf16.mxu0 0
        %1067 = vmatpush1.bf16.msra.mxu0 0
        %1068 = vmatprep.subr.bf16.mxu0 0
        %1069 = vmatpush1.bf16.msra.mxu0 0
        %1070 = vmatprep.subr.bf16.mxu0 0
        %1071 = vmatpush1.bf16.msra.mxu0 0
        %1072 = vmatprep.subr.bf16.mxu0 0
        %1073 = vmatpush1.bf16.msra.mxu0 0
        %1074 = vmatprep.subr.bf16.mxu0 0
        %1075 = vmatpush1.bf16.msra.mxu0 0
        %1076 = vmatprep.subr.bf16.mxu0 0
        %1077 = vmatpush1.bf16.msra.mxu0 0
        %1078 = vmatprep.subr.bf16.mxu0 0
        %1079 = vmatpush1.bf16.msra.mxu0 0
        %1080 = vmatprep.subr.bf16.mxu0 0
        %1081 = vmatpush1.bf16.msra.mxu0 0
        %1082 = vmatprep.subr.bf16.mxu0 0
        %1083 = vmatpush1.bf16.msra.mxu0 0
        %1084 = vmatprep.mubr.bf16.mxu0 0
        %1085 = vmatmul.mubr.bf16.gmra.mrb[0].mxu0 %v1050
        %v1086 = vpop.f32.mrb[0].mxu0
        %v1087 = vadd.f32 %v1034, %v1086
        %v1088 = vpop.f32.mrb[0].mxu0
        %v1089 = vpop.f32.mrb[0].mxu0
        %v1090 = vpop.f32.mrb[0].mxu0
        %1091 = vdwg.mxu0
        %v1092 = vpack.c.bf16 %v1087, %v1087
        %vm1093 = vcmask 60416
        %1094 = vst.msk [vmem:[#allocation4] sm:$0xf] %vm1093, %v1092
        %v1096 = vunpack.c.l.b16 %v1092
        %v1097 = vpack.c.b16 %v1096, %v1096
        %1098 = vrot.lane.b32.xlu0 %v1097, 120
        %v1099 = vpop.permute.xlu0 %1098
        %s1101 = scalar_lea.vmem [#allocation4], 4
        %1102 = vst.msk [vmem:[%s1101] sm:$0xf] %vm1093, %v1099
        %1103 = vrot.lane.b32.xlu0 %v1097, 112
        %v1104 = vpop.permute.xlu0 %1103
        %s1106 = scalar_lea.vmem [#allocation4], 8
        %1107 = vst.msk [vmem:[%s1106] sm:$0xf] %vm1093, %v1104
        %1108 = vrot.lane.b32.xlu0 %v1097, 104
        %v1109 = vpop.permute.xlu0 %1108
        %s1111 = scalar_lea.vmem [#allocation4], 12
        %1112 = vst.msk [vmem:[%s1111] sm:$0xf] %vm1093, %v1109
        %v1113 = vld [vmem:[#allocation4] sm:$0xf]
        %v1114 = vld [vmem:[#allocation4 + $0x4] sm:$0xf]
        %v1115 = vld [vmem:[#allocation4 + $0x8] sm:$0xf]
        %v1116 = vld [vmem:[#allocation4 + $0xc] sm:$0xf]
        %v1117 = vld [vmem:[#allocation2] sm:$0xf]
        %v1118 = vld [vmem:[#allocation2 + $0x4] sm:$0xf]
        %v1119 = vld [vmem:[#allocation2 + $0x8] sm:$0xf]
        %v1120 = vld [vmem:[#allocation2 + $0xc] sm:$0xf]
        %v1121 = vld [vmem:[%s839] sm:$0xff]
        %vm1122 = vcmask 64512
        %v1124 = vsel %vm1122, %v1113, 0
        %v1127 = vsel %vm1122, %v1117, 0
        %1129 = vmatprep.subr.bf16.mxu0 0
        %1130 = vmatpush1.bf16.xpose.msra.mxu0 %v1127
        %1131 = vmatprep.subr.bf16.mxu0 0
        %1132 = vmatpush1.bf16.xpose.msra.mxu0 0
        %1133 = vmatprep.subr.bf16.mxu0 0
        %1134 = vmatpush1.bf16.xpose.msra.mxu0 0
        %1135 = vmatprep.subr.bf16.mxu0 0
        %1136 = vmatpush1.bf16.xpose.msra.mxu0 0
        %1137 = vmatprep.subr.bf16.mxu0 0
        %1138 = vmatpush1.bf16.xpose.msra.mxu0 0
        %1139 = vmatprep.subr.bf16.mxu0 0
        %1140 = vmatpush1.bf16.xpose.msra.mxu0 0
        %1141 = vmatprep.subr.bf16.mxu0 0
        %1142 = vmatpush1.bf16.xpose.msra.mxu0 0
        %1143 = vmatprep.subr.bf16.mxu0 0
        %1144 = vmatpush1.bf16.xpose.msra.mxu0 0
        %1145 = vmatprep.subr.bf16.mxu0 0
        %1146 = vmatpush1.bf16.xpose.msra.mxu0 0
        %1147 = vmatprep.subr.bf16.mxu0 0
        %1148 = vmatpush1.bf16.xpose.msra.mxu0 0
        %1149 = vmatprep.subr.bf16.mxu0 0
        %1150 = vmatpush1.bf16.xpose.msra.mxu0 0
        %1151 = vmatprep.subr.bf16.mxu0 0
        %1152 = vmatpush1.bf16.xpose.msra.mxu0 0
        %1153 = vmatprep.subr.bf16.mxu0 0
        %1154 = vmatpush1.bf16.xpose.msra.mxu0 0
        %1155 = vmatprep.subr.bf16.mxu0 0
        %1156 = vmatpush1.bf16.xpose.msra.mxu0 0
        %1157 = vmatprep.subr.bf16.mxu0 0
        %1158 = vmatpush1.bf16.xpose.msra.mxu0 0
        %1159 = vmatprep.subr.bf16.mxu0 0
        %1160 = vmatpush1.bf16.xpose.msra.mxu0 0
        %1161 = vmatprep.mubr.bf16.mxu0 0
        %1162 = vmatmul.mubr.bf16.gmra.mrb[0].mxu0 %v1124
        %v1163 = vpop.f32.mrb[0].mxu0
        %v1164 = vadd.f32 %v1121, %v1163
        %v1165 = vpop.f32.mrb[0].mxu0
        %v1166 = vpop.f32.mrb[0].mxu0
        %v1167 = vpop.f32.mrb[0].mxu0
        %1168 = vdwg.mxu0
        %v1170 = vsel %vm1122, %v1114, 0
        %v1173 = vsel %vm1122, %v1118, 0
        %1175 = vmatprep.subr.bf16.mxu0 0
        %1176 = vmatpush1.bf16.xpose.msra.mxu0 %v1173
        %1177 = vmatprep.subr.bf16.mxu0 0
        %1178 = vmatpush1.bf16.xpose.msra.mxu0 0
        %1179 = vmatprep.subr.bf16.mxu0 0
        %1180 = vmatpush1.bf16.xpose.msra.mxu0 0
        %1181 = vmatprep.subr.bf16.mxu0 0
        %1182 = vmatpush1.bf16.xpose.msra.mxu0 0
        %1183 = vmatprep.subr.bf16.mxu0 0
        %1184 = vmatpush1.bf16.xpose.msra.mxu0 0
        %1185 = vmatprep.subr.bf16.mxu0 0
        %1186 = vmatpush1.bf16.xpose.msra.mxu0 0
        %1187 = vmatprep.subr.bf16.mxu0 0
        %1188 = vmatpush1.bf16.xpose.msra.mxu0 0
        %1189 = vmatprep.subr.bf16.mxu0 0
        %1190 = vmatpush1.bf16.xpose.msra.mxu0 0
        %1191 = vmatprep.subr.bf16.mxu0 0
        %1192 = vmatpush1.bf16.xpose.msra.mxu0 0
        %1193 = vmatprep.subr.bf16.mxu0 0
        %1194 = vmatpush1.bf16.xpose.msra.mxu0 0
        %1195 = vmatprep.subr.bf16.mxu0 0
        %1196 = vmatpush1.bf16.xpose.msra.mxu0 0
        %1197 = vmatprep.subr.bf16.mxu0 0
        %1198 = vmatpush1.bf16.xpose.msra.mxu0 0
        %1199 = vmatprep.subr.bf16.mxu0 0
        %1200 = vmatpush1.bf16.xpose.msra.mxu0 0
        %1201 = vmatprep.subr.bf16.mxu0 0
        %1202 = vmatpush1.bf16.xpose.msra.mxu0 0
        %1203 = vmatprep.subr.bf16.mxu0 0
        %1204 = vmatpush1.bf16.xpose.msra.mxu0 0
        %1205 = vmatprep.subr.bf16.mxu0 0
        %1206 = vmatpush1.bf16.xpose.msra.mxu0 0
        %1207 = vmatprep.mubr.bf16.mxu0 0
        %1208 = vmatmul.mubr.bf16.gmra.mrb[0].mxu0 %v1170
        %v1209 = vpop.f32.mrb[0].mxu0
        %v1210 = vadd.f32 %v1121, %v1209
        %v1211 = vpop.f32.mrb[0].mxu0
        %v1212 = vpop.f32.mrb[0].mxu0
        %v1213 = vpop.f32.mrb[0].mxu0
        %1214 = vdwg.mxu0
        %v1216 = vsel %vm1122, %v1115, 0
        %v1219 = vsel %vm1122, %v1119, 0
        %1221 = vmatprep.subr.bf16.mxu0 0
        %1222 = vmatpush1.bf16.xpose.msra.mxu0 %v1219
        %1223 = vmatprep.subr.bf16.mxu0 0
        %1224 = vmatpush1.bf16.xpose.msra.mxu0 0
        %1225 = vmatprep.subr.bf16.mxu0 0
        %1226 = vmatpush1.bf16.xpose.msra.mxu0 0
        %1227 = vmatprep.subr.bf16.mxu0 0
        %1228 = vmatpush1.bf16.xpose.msra.mxu0 0
        %1229 = vmatprep.subr.bf16.mxu0 0
        %1230 = vmatpush1.bf16.xpose.msra.mxu0 0
        %1231 = vmatprep.subr.bf16.mxu0 0
        %1232 = vmatpush1.bf16.xpose.msra.mxu0 0
        %1233 = vmatprep.subr.bf16.mxu0 0
        %1234 = vmatpush1.bf16.xpose.msra.mxu0 0
        %1235 = vmatprep.subr.bf16.mxu0 0
        %1236 = vmatpush1.bf16.xpose.msra.mxu0 0
        %1237 = vmatprep.subr.bf16.mxu0 0
        %1238 = vmatpush1.bf16.xpose.msra.mxu0 0
        %1239 = vmatprep.subr.bf16.mxu0 0
        %1240 = vmatpush1.bf16.xpose.msra.mxu0 0
        %1241 = vmatprep.subr.bf16.mxu0 0
        %1242 = vmatpush1.bf16.xpose.msra.mxu0 0
        %1243 = vmatprep.subr.bf16.mxu0 0
        %1244 = vmatpush1.bf16.xpose.msra.mxu0 0
        %1245 = vmatprep.subr.bf16.mxu0 0
        %1246 = vmatpush1.bf16.xpose.msra.mxu0 0
        %1247 = vmatprep.subr.bf16.mxu0 0
        %1248 = vmatpush1.bf16.xpose.msra.mxu0 0
        %1249 = vmatprep.subr.bf16.mxu0 0
        %1250 = vmatpush1.bf16.xpose.msra.mxu0 0
        %1251 = vmatprep.subr.bf16.mxu0 0
        %1252 = vmatpush1.bf16.xpose.msra.mxu0 0
        %1253 = vmatprep.mubr.bf16.mxu0 0
        %1254 = vmatmul.mubr.bf16.gmra.mrb[0].mxu0 %v1216
        %v1255 = vpop.f32.mrb[0].mxu0
        %v1256 = vadd.f32 %v1121, %v1255
        %v1257 = vpop.f32.mrb[0].mxu0
        %v1258 = vpop.f32.mrb[0].mxu0
        %v1259 = vpop.f32.mrb[0].mxu0
        %1260 = vdwg.mxu0
        %v1262 = vsel %vm1122, %v1116, 0
        %v1265 = vsel %vm1122, %v1120, 0
        %1267 = vmatprep.subr.bf16.mxu0 0
        %1268 = vmatpush1.bf16.xpose.msra.mxu0 %v1265
        %1269 = vmatprep.subr.bf16.mxu0 0
        %1270 = vmatpush1.bf16.xpose.msra.mxu0 0
        %1271 = vmatprep.subr.bf16.mxu0 0
        %1272 = vmatpush1.bf16.xpose.msra.mxu0 0
        %1273 = vmatprep.subr.bf16.mxu0 0
        %1274 = vmatpush1.bf16.xpose.msra.mxu0 0
        %1275 = vmatprep.subr.bf16.mxu0 0
        %1276 = vmatpush1.bf16.xpose.msra.mxu0 0
        %1277 = vmatprep.subr.bf16.mxu0 0
        %1278 = vmatpush1.bf16.xpose.msra.mxu0 0
        %1279 = vmatprep.subr.bf16.mxu0 0
        %1280 = vmatpush1.bf16.xpose.msra.mxu0 0
        %1281 = vmatprep.subr.bf16.mxu0 0
        %1282 = vmatpush1.bf16.xpose.msra.mxu0 0
        %1283 = vmatprep.subr.bf16.mxu0 0
        %1284 = vmatpush1.bf16.xpose.msra.mxu0 0
        %1285 = vmatprep.subr.bf16.mxu0 0
        %1286 = vmatpush1.bf16.xpose.msra.mxu0 0
        %1287 = vmatprep.subr.bf16.mxu0 0
        %1288 = vmatpush1.bf16.xpose.msra.mxu0 0
        %1289 = vmatprep.subr.bf16.mxu0 0
        %1290 = vmatpush1.bf16.xpose.msra.mxu0 0
        %1291 = vmatprep.subr.bf16.mxu0 0
        %1292 = vmatpush1.bf16.xpose.msra.mxu0 0
        %1293 = vmatprep.subr.bf16.mxu0 0
        %1294 = vmatpush1.bf16.xpose.msra.mxu0 0
        %1295 = vmatprep.subr.bf16.mxu0 0
        %1296 = vmatpush1.bf16.xpose.msra.mxu0 0
        %1297 = vmatprep.subr.bf16.mxu0 0
        %1298 = vmatpush1.bf16.xpose.msra.mxu0 0
        %1299 = vmatprep.mubr.bf16.mxu0 0
        %1300 = vmatmul.mubr.bf16.gmra.mrb[0].mxu0 %v1262
        %v1301 = vpop.f32.mrb[0].mxu0
        %v1302 = vadd.f32 %v1121, %v1301
        %v1303 = vpop.f32.mrb[0].mxu0
        %v1304 = vpop.f32.mrb[0].mxu0
        %v1305 = vpop.f32.mrb[0].mxu0
        %1306 = vdwg.mxu0
        %v1307 = vsel %vm1122, %v1164, -inf
        %1308 = vmax.xlane.f32.xlu0 %v1307
        %v1309 = vpop.xlane.xlu0 %1308
        %v1310 = vsel %vm1122, %v1210, -inf
        %1311 = vmax.xlane.f32.xlu0 %v1310
        %v1312 = vpop.xlane.xlu0 %1311
        %v1313 = vsel %vm1122, %v1256, -inf
        %1314 = vmax.xlane.f32.xlu0 %v1313
        %v1315 = vpop.xlane.xlu0 %1314
        %v1316 = vsel %vm1122, %v1302, -inf
        %1317 = vmax.xlane.f32.xlu0 %v1316
        %v1318 = vpop.xlane.xlu0 %1317
        %v1319 = vsub.f32 %v1164, %v1309
        %v1320 = vsub.f32 %v1210, %v1312
        %v1321 = vsub.f32 %v1256, %v1315
        %v1322 = vsub.f32 %v1302, %v1318
        %v1323 = vmul.f32 %v1319, 1.442695
        %v1324 = vpow.pop %v1323
        %v1325 = vmul.f32 %v1320, 1.442695
        %v1326 = vpow.pop %v1325
        %v1327 = vmul.f32 %v1321, 1.442695
        %v1328 = vpow.pop %v1327
        %v1329 = vmul.f32 %v1322, 1.442695
        %v1330 = vpow.pop %v1329
        %v1331 = vsel %vm1122, %v1324, 0.0
        %1332 = vadd.xlane.f32.xlu0 %v1331
        %v1333 = vpop.xlane.xlu0 %1332
        %v1334 = vsel %vm1122, %v1326, 0.0
        %1335 = vadd.xlane.f32.xlu0 %v1334
        %v1336 = vpop.xlane.xlu0 %1335
        %v1337 = vsel %vm1122, %v1328, 0.0
        %1338 = vadd.xlane.f32.xlu0 %v1337
        %v1339 = vpop.xlane.xlu0 %1338
        %v1340 = vsel %vm1122, %v1330, 0.0
        %1341 = vadd.xlane.f32.xlu0 %v1340
        %v1342 = vpop.xlane.xlu0 %1341
        %v1343 = vpack.c.bf16 %v1324, %v1324
        %v1344 = vpack.c.bf16 %v1326, %v1326
        %v1345 = vpack.c.bf16 %v1328, %v1328
        %v1346 = vpack.c.bf16 %v1330, %v1330
        %v1347 = vld [vmem:[#allocation3] sm:$0xf]
        %v1348 = vld [vmem:[#allocation3 + $0x4] sm:$0xf]
        %v1349 = vld [vmem:[#allocation3 + $0x8] sm:$0xf]
        %v1350 = vld [vmem:[#allocation3 + $0xc] sm:$0xf]
        %v1352 = vsel %vm1122, %v1343, 0
        %vm1354 = vcmask 1043456
        %v1356 = vsel %vm1354, %v1347, 0
        %1358 = vmatprep.subr.bf16.mxu0 0
        %1359 = vmatpush1.bf16.msra.mxu0 %v1356
        %1360 = vmatprep.subr.bf16.mxu0 0
        %1361 = vmatpush1.bf16.msra.mxu0 0
        %1362 = vmatprep.subr.bf16.mxu0 0
        %1363 = vmatpush1.bf16.msra.mxu0 0
        %1364 = vmatprep.subr.bf16.mxu0 0
        %1365 = vmatpush1.bf16.msra.mxu0 0
        %1366 = vmatprep.subr.bf16.mxu0 0
        %1367 = vmatpush1.bf16.msra.mxu0 0
        %1368 = vmatprep.subr.bf16.mxu0 0
        %1369 = vmatpush1.bf16.msra.mxu0 0
        %1370 = vmatprep.subr.bf16.mxu0 0
        %1371 = vmatpush1.bf16.msra.mxu0 0
        %1372 = vmatprep.subr.bf16.mxu0 0
        %1373 = vmatpush1.bf16.msra.mxu0 0
        %1374 = vmatprep.subr.bf16.mxu0 0
        %1375 = vmatpush1.bf16.msra.mxu0 0
        %1376 = vmatprep.subr.bf16.mxu0 0
        %1377 = vmatpush1.bf16.msra.mxu0 0
        %1378 = vmatprep.subr.bf16.mxu0 0
        %1379 = vmatpush1.bf16.msra.mxu0 0
        %1380 = vmatprep.subr.bf16.mxu0 0
        %1381 = vmatpush1.bf16.msra.mxu0 0
        %1382 = vmatprep.subr.bf16.mxu0 0
        %1383 = vmatpush1.bf16.msra.mxu0 0
        %1384 = vmatprep.subr.bf16.mxu0 0
        %1385 = vmatpush1.bf16.msra.mxu0 0
        %1386 = vmatprep.subr.bf16.mxu0 0
        %1387 = vmatpush1.bf16.msra.mxu0 0
        %1388 = vmatprep.subr.bf16.mxu0 0
        %1389 = vmatpush1.bf16.msra.mxu0 0
        %1390 = vmatprep.mubr.bf16.mxu0 0
        %1391 = vmatmul.mubr.bf16.gmra.mrb[0].mxu0 %v1352
        %v1392 = vpop.f32.mrb[0].mxu0
        %v1393 = vadd.f32 0.0, %v1392
        %v1394 = vpop.f32.mrb[0].mxu0
        %v1395 = vpop.f32.mrb[0].mxu0
        %v1396 = vpop.f32.mrb[0].mxu0
        %1397 = vdwg.mxu0
        %v1399 = vsel %vm1122, %v1344, 0
        %v1402 = vsel %vm1354, %v1348, 0
        %1404 = vmatprep.subr.bf16.mxu0 0
        %1405 = vmatpush1.bf16.msra.mxu0 %v1402
        %1406 = vmatprep.subr.bf16.mxu0 0
        %1407 = vmatpush1.bf16.msra.mxu0 0
        %1408 = vmatprep.subr.bf16.mxu0 0
        %1409 = vmatpush1.bf16.msra.mxu0 0
        %1410 = vmatprep.subr.bf16.mxu0 0
        %1411 = vmatpush1.bf16.msra.mxu0 0
        %1412 = vmatprep.subr.bf16.mxu0 0
        %1413 = vmatpush1.bf16.msra.mxu0 0
        %1414 = vmatprep.subr.bf16.mxu0 0
        %1415 = vmatpush1.bf16.msra.mxu0 0
        %1416 = vmatprep.subr.bf16.mxu0 0
        %1417 = vmatpush1.bf16.msra.mxu0 0
        %1418 = vmatprep.subr.bf16.mxu0 0
        %1419 = vmatpush1.bf16.msra.mxu0 0
        %1420 = vmatprep.subr.bf16.mxu0 0
        %1421 = vmatpush1.bf16.msra.mxu0 0
        %1422 = vmatprep.subr.bf16.mxu0 0
        %1423 = vmatpush1.bf16.msra.mxu0 0
        %1424 = vmatprep.subr.bf16.mxu0 0
        %1425 = vmatpush1.bf16.msra.mxu0 0
        %1426 = vmatprep.subr.bf16.mxu0 0
        %1427 = vmatpush1.bf16.msra.mxu0 0
        %1428 = vmatprep.subr.bf16.mxu0 0
        %1429 = vmatpush1.bf16.msra.mxu0 0
        %1430 = vmatprep.subr.bf16.mxu0 0
        %1431 = vmatpush1.bf16.msra.mxu0 0
        %1432 = vmatprep.subr.bf16.mxu0 0
        %1433 = vmatpush1.bf16.msra.mxu0 0
        %1434 = vmatprep.subr.bf16.mxu0 0
        %1435 = vmatpush1.bf16.msra.mxu0 0
        %1436 = vmatprep.mubr.bf16.mxu0 0
        %1437 = vmatmul.mubr.bf16.gmra.mrb[0].mxu0 %v1399
        %v1438 = vpop.f32.mrb[0].mxu0
        %v1439 = vadd.f32 0.0, %v1438
        %v1440 = vpop.f32.mrb[0].mxu0
        %v1441 = vpop.f32.mrb[0].mxu0
        %v1442 = vpop.f32.mrb[0].mxu0
        %1443 = vdwg.mxu0
        %v1445 = vsel %vm1122, %v1345, 0
        %v1448 = vsel %vm1354, %v1349, 0
        %1450 = vmatprep.subr.bf16.mxu0 0
        %1451 = vmatpush1.bf16.msra.mxu0 %v1448
        %1452 = vmatprep.subr.bf16.mxu0 0
        %1453 = vmatpush1.bf16.msra.mxu0 0
        %1454 = vmatprep.subr.bf16.mxu0 0
        %1455 = vmatpush1.bf16.msra.mxu0 0
        %1456 = vmatprep.subr.bf16.mxu0 0
        %1457 = vmatpush1.bf16.msra.mxu0 0
        %1458 = vmatprep.subr.bf16.mxu0 0
        %1459 = vmatpush1.bf16.msra.mxu0 0
        %1460 = vmatprep.subr.bf16.mxu0 0
        %1461 = vmatpush1.bf16.msra.mxu0 0
        %1462 = vmatprep.subr.bf16.mxu0 0
        %1463 = vmatpush1.bf16.msra.mxu0 0
        %1464 = vmatprep.subr.bf16.mxu0 0
        %1465 = vmatpush1.bf16.msra.mxu0 0
        %1466 = vmatprep.subr.bf16.mxu0 0
        %1467 = vmatpush1.bf16.msra.mxu0 0
        %1468 = vmatprep.subr.bf16.mxu0 0
        %1469 = vmatpush1.bf16.msra.mxu0 0
        %1470 = vmatprep.subr.bf16.mxu0 0
        %1471 = vmatpush1.bf16.msra.mxu0 0
        %1472 = vmatprep.subr.bf16.mxu0 0
        %1473 = vmatpush1.bf16.msra.mxu0 0
        %1474 = vmatprep.subr.bf16.mxu0 0
        %1475 = vmatpush1.bf16.msra.mxu0 0
        %1476 = vmatprep.subr.bf16.mxu0 0
        %1477 = vmatpush1.bf16.msra.mxu0 0
        %1478 = vmatprep.subr.bf16.mxu0 0
        %1479 = vmatpush1.bf16.msra.mxu0 0
        %1480 = vmatprep.subr.bf16.mxu0 0
        %1481 = vmatpush1.bf16.msra.mxu0 0
        %1482 = vmatprep.mubr.bf16.mxu0 0
        %1483 = vmatmul.mubr.bf16.gmra.mrb[0].mxu0 %v1445
        %v1484 = vpop.f32.mrb[0].mxu0
        %v1485 = vadd.f32 0.0, %v1484
        %v1486 = vpop.f32.mrb[0].mxu0
        %v1487 = vpop.f32.mrb[0].mxu0
        %v1488 = vpop.f32.mrb[0].mxu0
        %1489 = vdwg.mxu0
        %v1491 = vsel %vm1122, %v1346, 0
        %v1494 = vsel %vm1354, %v1350, 0
        %1496 = vmatprep.subr.bf16.mxu0 0
        %1497 = vmatpush1.bf16.msra.mxu0 %v1494
        %1498 = vmatprep.subr.bf16.mxu0 0
        %1499 = vmatpush1.bf16.msra.mxu0 0
        %1500 = vmatprep.subr.bf16.mxu0 0
        %1501 = vmatpush1.bf16.msra.mxu0 0
        %1502 = vmatprep.subr.bf16.mxu0 0
        %1503 = vmatpush1.bf16.msra.mxu0 0
        %1504 = vmatprep.subr.bf16.mxu0 0
        %1505 = vmatpush1.bf16.msra.mxu0 0
        %1506 = vmatprep.subr.bf16.mxu0 0
        %1507 = vmatpush1.bf16.msra.mxu0 0
        %1508 = vmatprep.subr.bf16.mxu0 0
        %1509 = vmatpush1.bf16.msra.mxu0 0
        %1510 = vmatprep.subr.bf16.mxu0 0
        %1511 = vmatpush1.bf16.msra.mxu0 0
        %1512 = vmatprep.subr.bf16.mxu0 0
        %1513 = vmatpush1.bf16.msra.mxu0 0
        %1514 = vmatprep.subr.bf16.mxu0 0
        %1515 = vmatpush1.bf16.msra.mxu0 0
        %1516 = vmatprep.subr.bf16.mxu0 0
        %1517 = vmatpush1.bf16.msra.mxu0 0
        %1518 = vmatprep.subr.bf16.mxu0 0
        %1519 = vmatpush1.bf16.msra.mxu0 0
        %1520 = vmatprep.subr.bf16.mxu0 0
        %1521 = vmatpush1.bf16.msra.mxu0 0
        %1522 = vmatprep.subr.bf16.mxu0 0
        %1523 = vmatpush1.bf16.msra.mxu0 0
        %1524 = vmatprep.subr.bf16.mxu0 0
        %1525 = vmatpush1.bf16.msra.mxu0 0
        %1526 = vmatprep.subr.bf16.mxu0 0
        %1527 = vmatpush1.bf16.msra.mxu0 0
        %1528 = vmatprep.mubr.bf16.mxu0 0
        %1529 = vmatmul.mubr.bf16.gmra.mrb[0].mxu0 %v1491
        %v1530 = vpop.f32.mrb[0].mxu0
        %v1531 = vadd.f32 0.0, %v1530
        %v1532 = vpop.f32.mrb[0].mxu0
        %v1533 = vpop.f32.mrb[0].mxu0
        %v1534 = vpop.f32.mrb[0].mxu0
        %1535 = vdwg.mxu0
        %v1536 = vrcp.pop %v1333
        %v1537 = vrcp.pop %v1336
        %v1538 = vrcp.pop %v1339
        %v1539 = vrcp.pop %v1342
        %v1540 = vmul.f32 %v1393, %v1536
        %v1541 = vmul.f32 %v1439, %v1537
        %v1542 = vmul.f32 %v1485, %v1538
        %v1543 = vmul.f32 %v1531, %v1539
        %1544 = vst.msk [vmem:[#allocation5] sm:$0xff] %vm1122, %v1540
        %1546 = vrot.lane.b32.xlu0 %v1541, 8
        %v1547 = vpop.permute.xlu0 %1546
        %vm1549 = vcmask 130112
        %1550 = vst.msk [vmem:[#allocation5] sm:$0xff] %vm1549, %v1547
        %1552 = vrot.lane.b32.xlu0 %v1542, 16
        %v1553 = vpop.permute.xlu0 %1552
        %vm1555 = vcmask 195712
        %1556 = vst.msk [vmem:[#allocation5] sm:$0xff] %vm1555, %v1553
        %1558 = vrot.lane.b32.xlu0 %v1543, 24
        %v1559 = vpop.permute.xlu0 %1558
        %vm1561 = vcmask 261312
        %1562 = vst.msk [vmem:[#allocation5] sm:$0xff] %vm1561, %v1559
        %v1563 = vld [vmem:[#allocation5] sm:$0xff]
        %v1564 = vpack.c.bf16 %v1563, %v1563
        %v1565 = vld [vmem:[%s10] sm:$0xf]
        %v1566 = vld [vmem:[%s10 + $0x4] sm:$0xf]
        %v1567 = vld [vmem:[%s10 + $0x8] sm:$0xf]
        %v1568 = vld [vmem:[%s10 + $0xc] sm:$0xf]
        %v1569 = vld [vmem:[#allocation11] sm:$0x1]
        %v1571 = vlaneseq
        %v1572 = vshrl.u32 %v1571, 7
        %v1573 = vsub.s32 0, %v1572
        %v1574 = vrot.slane %v1569, %v1573
        %v1580 = vunpack.c.l.b16 %v1565
        %v1581 = vunpack.c.l.b16 %v1566
        %v1582 = vunpack.c.l.b16 %v1567
        %v1583 = vunpack.c.l.b16 %v1568
        %v1584 = vpack.c.b16 %v1581, %v1580
        %v1585 = vpack.c.b16 %v1583, %v1582
        %v1589 = vsel %vm1048, %v1564, 0
        %1591 = vmatprep.subr.bf16.mxu0 0
        %1592 = vmatpush1.bf16.msra.mxu0 %v1584
        %1593 = vmatprep.subr.bf16.mxu0 0
        %1594 = vmatpush1.bf16.msra.mxu0 %v1585
        %1595 = vmatprep.subr.bf16.mxu0 0
        %1596 = vmatpush1.bf16.msra.mxu0 0
        %1597 = vmatprep.subr.bf16.mxu0 0
        %1598 = vmatpush1.bf16.msra.mxu0 0
        %1599 = vmatprep.subr.bf16.mxu0 0
        %1600 = vmatpush1.bf16.msra.mxu0 0
        %1601 = vmatprep.subr.bf16.mxu0 0
        %1602 = vmatpush1.bf16.msra.mxu0 0
        %1603 = vmatprep.subr.bf16.mxu0 0
        %1604 = vmatpush1.bf16.msra.mxu0 0
        %1605 = vmatprep.subr.bf16.mxu0 0
        %1606 = vmatpush1.bf16.msra.mxu0 0
        %1607 = vmatprep.subr.bf16.mxu0 0
        %1608 = vmatpush1.bf16.msra.mxu0 0
        %1609 = vmatprep.subr.bf16.mxu0 0
        %1610 = vmatpush1.bf16.msra.mxu0 0
        %1611 = vmatprep.subr.bf16.mxu0 0
        %1612 = vmatpush1.bf16.msra.mxu0 0
        %1613 = vmatprep.subr.bf16.mxu0 0
        %1614 = vmatpush1.bf16.msra.mxu0 0
        %1615 = vmatprep.subr.bf16.mxu0 0
        %1616 = vmatpush1.bf16.msra.mxu0 0
        %1617 = vmatprep.subr.bf16.mxu0 0
        %1618 = vmatpush1.bf16.msra.mxu0 0
        %1619 = vmatprep.subr.bf16.mxu0 0
        %1620 = vmatpush1.bf16.msra.mxu0 0
        %1621 = vmatprep.subr.bf16.mxu0 0
        %1622 = vmatpush1.bf16.msra.mxu0 0
        %1623 = vmatprep.mubr.bf16.mxu0 0
        %1624 = vmatmul.mubr.bf16.gmra.mrb[0].mxu0 %v1589
        %v1625 = vpop.f32.mrb[0].mxu0
        %v1626 = vadd.f32 %v1574, %v1625
        %v1627 = vpop.f32.mrb[0].mxu0
        %v1628 = vpop.f32.mrb[0].mxu0
        %v1629 = vpop.f32.mrb[0].mxu0
        %1630 = vdwg.mxu0
        %v1631 = vadd.f32 %v1626, %v1023
        %v1632 = vsel %vm1048, %v1631, 0.0
        %1633 = vadd.xlane.f32.xlu0 %v1632
        %v1634 = vpop.xlane.xlu0 %1633
        %v1635 = vrcp.pop 32.0
        %v1636 = vmul.f32 %v1634, %v1635
        %v1637 = vsub.f32 %v1631, %v1636
        %v1638 = vmul.f32 %v1637, %v1637
        %v1639 = vsel %vm1048, %v1638, 0.0
        %1640 = vadd.xlane.f32.xlu0 %v1639
        %v1641 = vpop.xlane.xlu0 %1640
        %v1642 = vmul.f32 %v1641, %v1635
        %v1643 = vadd.f32 %v1642, 1e-05
        %v1644 = vrsqrt.pop %v1643
        %v1645 = vmul.f32 %v1637, %v1644
        %v1646 = vld [vmem:[#allocation12] sm:$0x1]
        %v1648 = vlaneseq
        %v1649 = vshrl.u32 %v1648, 7
        %v1650 = vsub.s32 0, %v1649
        %v1651 = vrot.slane %v1646, %v1650
        %v1653 = vmul.f32 %v1645, %v1651
        %v1654 = vld [vmem:[#allocation14] sm:$0x1]
        %v1656 = vlaneseq
        %v1657 = vshrl.u32 %v1656, 7
        %v1658 = vsub.s32 0, %v1657
        %v1659 = vrot.slane %v1654, %v1658
        %v1661 = vadd.f32 %v1653, %v1659
        %v1662 = vpack.c.bf16 %v1661, %v1661
        %v1663 = vld [vmem:[#allocation15] sm:$0xf]
        %v1664 = vld [vmem:[#allocation15 + $0x4] sm:$0xf]
        %v1665 = vld [vmem:[#allocation15 + $0x8] sm:$0xf]
        %v1666 = vld [vmem:[#allocation15 + $0xc] sm:$0xf]
        %v1667 = vld [vmem:[#allocation17] sm:$0x1]
        %v1669 = vlaneseq
        %v1670 = vshrl.u32 %v1669, 7
        %v1671 = vsub.s32 0, %v1670
        %v1672 = vrot.slane %v1667, %v1671
        %v1678 = vunpack.c.l.b16 %v1663
        %v1679 = vunpack.c.l.b16 %v1664
        %v1680 = vunpack.c.l.b16 %v1665
        %v1681 = vunpack.c.l.b16 %v1666
        %v1682 = vpack.c.b16 %v1679, %v1678
        %v1683 = vpack.c.b16 %v1681, %v1680
        %v1687 = vsel %vm1048, %v1662, 0
        %1689 = vmatprep.subr.bf16.mxu0 0
        %1690 = vmatpush1.bf16.msra.mxu0 %v1682
        %1691 = vmatprep.subr.bf16.mxu0 0
        %1692 = vmatpush1.bf16.msra.mxu0 %v1683
        %1693 = vmatprep.subr.bf16.mxu0 0
        %1694 = vmatpush1.bf16.msra.mxu0 0
        %1695 = vmatprep.subr.bf16.mxu0 0
        %1696 = vmatpush1.bf16.msra.mxu0 0
        %1697 = vmatprep.subr.bf16.mxu0 0
        %1698 = vmatpush1.bf16.msra.mxu0 0
        %1699 = vmatprep.subr.bf16.mxu0 0
        %1700 = vmatpush1.bf16.msra.mxu0 0
        %1701 = vmatprep.subr.bf16.mxu0 0
        %1702 = vmatpush1.bf16.msra.mxu0 0
        %1703 = vmatprep.subr.bf16.mxu0 0
        %1704 = vmatpush1.bf16.msra.mxu0 0
        %1705 = vmatprep.subr.bf16.mxu0 0
        %1706 = vmatpush1.bf16.msra.mxu0 0
        %1707 = vmatprep.subr.bf16.mxu0 0
        %1708 = vmatpush1.bf16.msra.mxu0 0
        %1709 = vmatprep.subr.bf16.mxu0 0
        %1710 = vmatpush1.bf16.msra.mxu0 0
        %1711 = vmatprep.subr.bf16.mxu0 0
        %1712 = vmatpush1.bf16.msra.mxu0 0
        %1713 = vmatprep.subr.bf16.mxu0 0
        %1714 = vmatpush1.bf16.msra.mxu0 0
        %1715 = vmatprep.subr.bf16.mxu0 0
        %1716 = vmatpush1.bf16.msra.mxu0 0
        %1717 = vmatprep.subr.bf16.mxu0 0
        %1718 = vmatpush1.bf16.msra.mxu0 0
        %1719 = vmatprep.subr.bf16.mxu0 0
        %1720 = vmatpush1.bf16.msra.mxu0 0
        %1721 = vmatprep.mubr.bf16.mxu0 0
        %1722 = vmatmul.mubr.bf16.gmra.mrb[0].mxu0 %v1687
        %v1723 = vpop.f32.mrb[0].mxu0
        %v1724 = vadd.f32 %v1672, %v1723
        %v1725 = vpop.f32.mrb[0].mxu0
        %v1726 = vpop.f32.mrb[0].mxu0
        %v1727 = vpop.f32.mrb[0].mxu0
        %1728 = vdwg.mxu0
        %vm1729 = vcmp.gt.f32.partialorder %v1724, 0.0
        %v1730 = vmul.f32 %v1724, 0.01
        %v1731 = vsel %vm1729, %v1724, %v1730
        %v1732 = vpack.c.bf16 %v1731, %v1731
        %v1733 = vld [vmem:[%s16] sm:$0xf]
        %v1734 = vld [vmem:[%s16 + $0x4] sm:$0xf]
        %v1735 = vld [vmem:[%s16 + $0x8] sm:$0xf]
        %v1736 = vld [vmem:[%s16 + $0xc] sm:$0xf]
        %v1737 = vld [vmem:[%s16 + $0x10] sm:$0xf]
        %v1738 = vld [vmem:[%s16 + $0x14] sm:$0xf]
        %v1739 = vld [vmem:[%s16 + $0x18] sm:$0xf]
        %v1740 = vld [vmem:[%s16 + $0x1c] sm:$0xf]
        %v1741 = vld [vmem:[#allocation18] sm:$0x1]
        %v1743 = vlaneseq
        %v1744 = vshrl.u32 %v1743, 7
        %v1745 = vsub.s32 0, %v1744
        %v1746 = vrot.slane %v1741, %v1745
        %v1756 = vunpack.c.l.b16 %v1733
        %v1757 = vunpack.c.l.b16 %v1734
        %v1758 = vunpack.c.l.b16 %v1735
        %v1759 = vunpack.c.l.b16 %v1736
        %v1760 = vunpack.c.l.b16 %v1737
        %v1761 = vunpack.c.l.b16 %v1738
        %v1762 = vunpack.c.l.b16 %v1739
        %v1763 = vunpack.c.l.b16 %v1740
        %v1764 = vpack.c.b16 %v1757, %v1756
        %v1765 = vpack.c.b16 %v1759, %v1758
        %v1766 = vpack.c.b16 %v1761, %v1760
        %v1767 = vpack.c.b16 %v1763, %v1762
        %vm1772 = vcmask 523264
        %v1774 = vsel %vm1772, %v1732, 0
        %1776 = vmatprep.subr.bf16.mxu0 0
        %1777 = vmatpush1.bf16.msra.mxu0 %v1764
        %1778 = vmatprep.subr.bf16.mxu0 0
        %1779 = vmatpush1.bf16.msra.mxu0 %v1765
        %1780 = vmatprep.subr.bf16.mxu0 0
        %1781 = vmatpush1.bf16.msra.mxu0 %v1766
        %1782 = vmatprep.subr.bf16.mxu0 0
        %1783 = vmatpush1.bf16.msra.mxu0 %v1767
        %1784 = vmatprep.subr.bf16.mxu0 0
        %1785 = vmatpush1.bf16.msra.mxu0 0
        %1786 = vmatprep.subr.bf16.mxu0 0
        %1787 = vmatpush1.bf16.msra.mxu0 0
        %1788 = vmatprep.subr.bf16.mxu0 0
        %1789 = vmatpush1.bf16.msra.mxu0 0
        %1790 = vmatprep.subr.bf16.mxu0 0
        %1791 = vmatpush1.bf16.msra.mxu0 0
        %1792 = vmatprep.subr.bf16.mxu0 0
        %1793 = vmatpush1.bf16.msra.mxu0 0
        %1794 = vmatprep.subr.bf16.mxu0 0
        %1795 = vmatpush1.bf16.msra.mxu0 0
        %1796 = vmatprep.subr.bf16.mxu0 0
        %1797 = vmatpush1.bf16.msra.mxu0 0
        %1798 = vmatprep.subr.bf16.mxu0 0
        %1799 = vmatpush1.bf16.msra.mxu0 0
        %1800 = vmatprep.subr.bf16.mxu0 0
        %1801 = vmatpush1.bf16.msra.mxu0 0
        %1802 = vmatprep.subr.bf16.mxu0 0
        %1803 = vmatpush1.bf16.msra.mxu0 0
        %1804 = vmatprep.subr.bf16.mxu0 0
        %1805 = vmatpush1.bf16.msra.mxu0 0
        %1806 = vmatprep.subr.bf16.mxu0 0
        %1807 = vmatpush1.bf16.msra.mxu0 0
        %1808 = vmatprep.mubr.bf16.mxu0 0
        %1809 = vmatmul.mubr.bf16.gmra.mrb[0].mxu0 %v1774
        %v1810 = vpop.f32.mrb[0].mxu0
        %v1811 = vadd.f32 %v1746, %v1810
        %v1812 = vpop.f32.mrb[0].mxu0
        %v1813 = vpop.f32.mrb[0].mxu0
        %v1814 = vpop.f32.mrb[0].mxu0
        %1815 = vdwg.mxu0
        %v1816 = vadd.f32 %v1811, %v1661
        %v1817 = vsel %vm1048, %v1816, 0.0
        %1818 = vadd.xlane.f32.xlu0 %v1817
        %v1819 = vpop.xlane.xlu0 %1818
        %v1820 = vmul.f32 %v1819, %v1635
        %v1821 = vsub.f32 %v1816, %v1820
        %v1822 = vmul.f32 %v1821, %v1821
        %v1823 = vsel %vm1048, %v1822, 0.0
        %1824 = vadd.xlane.f32.xlu0 %v1823
        %v1825 = vpop.xlane.xlu0 %1824
        %v1826 = vmul.f32 %v1825, %v1635
        %v1827 = vadd.f32 %v1826, 1e-05
        %v1828 = vrsqrt.pop %v1827
        %v1829 = vmul.f32 %v1821, %v1828
        %v1830 = vld [vmem:[#allocation20] sm:$0x1]
        %v1832 = vlaneseq
        %v1833 = vshrl.u32 %v1832, 7
        %v1834 = vsub.s32 0, %v1833
        %v1835 = vrot.slane %v1830, %v1834
        %v1837 = vmul.f32 %v1829, %v1835
        %v1838 = vld [vmem:[#allocation21] sm:$0x1]
        %v1840 = vlaneseq
        %v1841 = vshrl.u32 %v1840, 7
        %v1842 = vsub.s32 0, %v1841
        %v1843 = vrot.slane %v1838, %v1842
        %v1845 = vadd.f32 %v1837, %v1843
        %1846 = vst.msk [vmem:[%s817] sm:$0xff] %vm1048, %v1845
        %s1847 = sand.u32 %s506, 1
        %s1848 = scalar_lea.sflag [#allocation8], %s1847
        %s1849 = sand.u32 %s506, 1
        %s1850 = smul.addr %s1849, 8
        %s1851 = scalar_lea.vmem [#allocation23], %s1850
        // Predicated region
        $region145: #{transformer_block.1} parent=99 // pred_check
          %p1852 = pneg %p516
        $region146: #{transformer_block.1} parent=99 // pred_check_branch
          %1854 = sbr.rel (%p1852) target = $region148
        $region147: #{transformer_block.1} parent=99 // pred_region
          %s1856 = ssub.s32 128, 128
          %1857 = vsyncadd %s1848, %s1856
          %s1858 = sadd.s32 %s45, %s44
          %s1859 = smul.addr %s1858, 128
          %s1860 = scalar_lea.hbm %s20, %s1859
          %s1862 = sshll.u32 %s1851, 4
          %s1863 = int_to_ptr.vmem [resolvable:$true] %s1862
          %1865 = dma.vmem_to_hbm [thread:$0]  %s1863, 128, %s1860, %s1848
        $region148: #{transformer_block.1} parent=99 // pred_fallthru
          _
      $region100: #{transformer_block.1} parent=5 // pred_fallthru
        _
      %p1866 = scmp.le.s32.totalorder 2, %s35
      // Predicated region
      $region149: #{transformer_block.1} parent=5 // pred_check
        %p1867 = pneg %p1866
      $region150: #{transformer_block.1} parent=5 // pred_check_branch
        %1869 = sbr.rel (%p1867) target = $region152
      $region151: #{transformer_block.1} parent=5 // pred_region
        %s1870 = ssub.s32 %s35, 2
        // Predicated region
        $region153: #{transformer_block.1} parent=151 // pred_check
          %p1871 = pneg %p522
        $region154: #{transformer_block.1} parent=151 // pred_check_branch
          %1873 = sbr.rel (%p1871) target = $region156
        $region155: #{transformer_block.1} parent=151 // pred_region
          %s1874 = sand.u32 %s507, 1
          %s1875 = scalar_lea.sflag [#allocation8], %s1874
          %s1876 = sand.u32 %s507, 1
          %s1877 = smul.addr %s1876, 8
          %s1878 = scalar_lea.vmem [#allocation23], %s1877
          %1879 = dma.done %s1875, 128
        $region156: #{transformer_block.1} parent=151 // pred_fallthru
          _
      $region152: #{transformer_block.1} parent=5 // pred_fallthru
        _
    $region6: #{transformer_block.1} parent=1 // loop_footer
      %s39 = sadd.s32 1, %s35
    $region7: #{transformer_block.1} parent=1 // loop_footer_branch
      %34 = sbr.rel target = $region3
    $region8: #{transformer_block.1} parent=1 // loop_exit
      _
    %1880 = vsyncpa [#allocation7], 1
    %s1881 = scalar_lea.sflag [#allocation7], 1
    %1882 = vsyncpa %s1881, 1
    %1883 = vsyncpa [#allocation10], 1
    %1884 = vsyncpa [#allocation13], 1
    %1885 = vsyncpa [#allocation16], 1
    %1886 = vsyncpa [#allocation19], 1
    %1887 = vsyncpa [#allocation22], 1
    %1888 = vsyncpa [#allocation8], 1
    %s1889 = scalar_lea.sflag [#allocation8], 1
    %1890 = vsyncpa %s1889, 1

</llo_original>
